<compile_context>
chip_gen: v7x
topology: tpu7x:2x2x1
jax: 0.10.0
libtpu: 0.0.40
codegen_flags: <defaults>
</compile_context>

<pallas_src>
import functools

import jax
import jax.numpy as jnp
from jax.experimental import pallas as pl
from jax.experimental.pallas import tpu as pltpu

# Finite "-inf" so the online-logsumexp rescale never evaluates inf - inf.
_NEG = -1.0e30


def _round_up(x: int, m: int) -> int:
    return ((x + m - 1) // m) * m


def _circle_loss_kernel(fi_ref, fjt_ref, li_ref, lj_ref,
                        mp_out, sp_out, mn_out, sn_out,
                        mp_sc, sp_sc, mn_sc, sn_sc,
                        *, margin: float, gamma: float, k: float,
                        n_valid: int, tile_i: int, tile_j: int,
                        mask_cols: bool):
    i_blk = pl.program_id(0)
    j_blk = pl.program_id(1)
    last_j = pl.num_programs(1) - 1

    @pl.when(j_blk == 0)
    def _init():
        mp_sc[...] = jnp.full((tile_i, 1), _NEG, dtype=jnp.float32)
        sp_sc[...] = jnp.zeros((tile_i, 1), dtype=jnp.float32)
        mn_sc[...] = jnp.full((tile_i, 1), _NEG, dtype=jnp.float32)
        sn_sc[...] = jnp.zeros((tile_i, 1), dtype=jnp.float32)

    # With square tiles, block (i, j) contains pairs with col > row only when
    # j >= i: skip entirely-lower-triangular blocks (halves MXU/VPU/EUP work).
    @pl.when(j_blk >= i_blk)
    def _compute():
        fi = fi_ref[...]                       # (tile_i, D), input dtype
        fjt = fjt_ref[...]                     # (D, tile_j), input dtype
        sim = jnp.dot(fi, fjt, preferred_element_type=jnp.float32)  # (TI, TJ)

        row = (i_blk * tile_i
               + jax.lax.broadcasted_iota(jnp.int32, (tile_i, tile_j), 0))
        col = (j_blk * tile_j
               + jax.lax.broadcasted_iota(jnp.int32, (tile_i, tile_j), 1))
        # strict upper triangle; padded columns only exist when mask_cols
        # (padded rows are implied invalid since col < n_valid => row < n_valid)
        in_tri = col > row
        if mask_cols:
            in_tri = jnp.logical_and(in_tri, col < n_valid)
        same = li_ref[...] == lj_ref[...]      # (TI,1) == (1,TJ) -> (TI,TJ)
        pos_mask = jnp.logical_and(in_tri, same)
        neg_mask = jnp.logical_and(in_tri, jnp.logical_not(same))

        m = jnp.float32(margin)
        # Fold gamma (and the sign for the positive branch) into the clamp
        # factor: saves one mul per element per branch on the VPU.
        neg_g_ap = jnp.float32(-gamma / k) * jnp.maximum(1.0 + m - sim, 0.0)
        g_an = jnp.float32(gamma) * jnp.maximum(sim + m, 0.0)
        logit_p = neg_g_ap * (sim - (1.0 - m))
        logit_n = g_an * (sim - m)

        def _update(mask, logit, m_ref, s_ref):
            # single-pass online masked logsumexp, per row
            tile_max = jnp.max(jnp.where(mask, logit, _NEG), axis=1,
                               keepdims=True)                       # (TI, 1)
            m_old = m_ref[...]
            m_new = jnp.maximum(m_old, tile_max)
            # exp of masked entries may overflow to +inf but the select drops it
            p = jnp.where(mask, jnp.exp(logit - m_new), 0.0)
            s_ref[...] = (s_ref[...] * jnp.exp(m_old - m_new)
                          + jnp.sum(p, axis=1, keepdims=True))
            m_ref[...] = m_new

        _update(pos_mask, logit_p, mp_sc, sp_sc)
        _update(neg_mask, logit_n, mn_sc, sn_sc)

    @pl.when(j_blk == last_j)
    def _finalize():
        mp_out[...] = mp_sc[...]
        sp_out[...] = sp_sc[...]
        mn_out[...] = mn_sc[...]
        sn_out[...] = sn_sc[...]


def circle_loss(features, labels, *, margin=0.4, gamma=128.0, k=1.0, block=256):
    """features: (N, D) float32/bfloat16, labels: (N,) int. Returns f32 scalar."""
    n, d = features.shape

    n8 = _round_up(max(n, 8), 8)
    if block >= n8:
        tile = n8                        # single tile covers the (padded) batch
    else:
        tile = _round_up(block, 128)     # lane-aligned tiles when actually tiling
    n_pad = _round_up(n, tile)

    feats = features                     # keep input dtype (bf16 stays bf16 on MXU)
    labels = labels.astype(jnp.int32)
    if n_pad != n:
        feats = jnp.pad(feats, ((0, n_pad - n), (0, 0)))
        labels = jnp.pad(labels, (0, n_pad - n), constant_values=-1)

    feats_t = feats.T                    # (D, N): MXU gets (TI,D)x(D,TJ) directly
    lab_col = labels.reshape(n_pad, 1)
    lab_row = labels.reshape(1, n_pad)

    gi = n_pad // tile

    kernel = functools.partial(
        _circle_loss_kernel, margin=float(margin), gamma=float(gamma),
        k=float(k), n_valid=n, tile_i=tile, tile_j=tile,
        mask_cols=(n_pad != n))

    out_row = jax.ShapeDtypeStruct((n_pad, 1), jnp.float32)
    row_spec = pl.BlockSpec((tile, 1), lambda i, j: (i, 0))

    mp, sp, mn_, sn = pl.pallas_call(
        kernel,
        out_shape=(out_row, out_row, out_row, out_row),
        grid_spec=pltpu.PrefetchScalarGridSpec(
            num_scalar_prefetch=0,
            grid=(gi, gi),
            in_specs=[
                pl.BlockSpec((tile, d), lambda i, j: (i, 0)),   # row features
                pl.BlockSpec((d, tile), lambda i, j: (0, j)),   # col features (pre-T)
                pl.BlockSpec((tile, 1), lambda i, j: (i, 0)),   # labels column
                pl.BlockSpec((1, tile), lambda i, j: (0, j)),   # labels row
            ],
            out_specs=[row_spec, row_spec, row_spec, row_spec],
            scratch_shapes=[pltpu.VMEM((tile, 1), jnp.float32)
                            for _ in range(4)],
        ),
        compiler_params=pltpu.CompilerParams(
            dimension_semantics=("parallel", "arbitrary")),
    )(feats, feats_t, lab_col, lab_row)

    # Tiny plain-JAX epilogue: combine per-row partial (max, sum) pairs,
    # then softplus.  Degenerate batches (no pos or no neg pairs) give
    # log(0) = -inf -> loss 0, matching torch.logsumexp over an empty tensor.
    def _combine(m_part, s_part):
        m_max = jnp.max(m_part)
        total = jnp.sum(s_part * jnp.exp(m_part - m_max))
        return m_max + jnp.log(total)

    lse_p = _combine(mp[:, 0], sp[:, 0])
    lse_n = _combine(mn_[:, 0], sn[:, 0])
    return jax.nn.softplus(lse_p + lse_n)


def _circle_loss_ref(features, labels, *, margin=0.4, gamma=128.0, k=1.0):
    """Pure-JAX reference mirroring the PyTorch module."""
    f = features.astype(jnp.float32)
    sim = f @ f.T
    n = f.shape[0]
    eq = labels[:, None] == labels[None, :]
    triu1 = jnp.triu(jnp.ones((n, n), dtype=bool), k=1)
    pos = jnp.logical_and(eq, triu1)
    neg = jnp.logical_and(~eq, triu1)
    ap = (1.0 / k) * jnp.maximum(1.0 + margin - sim, 0.0)
    an = jnp.maximum(sim + margin, 0.0)
    logit_p = -ap * (sim - (1.0 - margin)) * gamma
    logit_n = an * (sim - margin) * gamma
    lse_p = jax.scipy.special.logsumexp(jnp.where(pos, logit_p, -jnp.inf))
    lse_n = jax.scipy.special.logsumexp(jnp.where(neg, logit_n, -jnp.inf))
    return jax.nn.softplus(lse_n + lse_p)


if __name__ == "__main__":
    key = jax.random.PRNGKey(0)
    kf, kl = jax.random.split(key)
    N, D = 256, 64
    # Quantize features to multiples of 1/4 so f32 and bf16 matmul paths give
    # bit-identical similarities (makes the tolerance check robust).
    feats = jnp.round(jax.random.normal(kf, (N, D), dtype=jnp.float32) * 2.0) / 4.0
    labels = jax.random.randint(kl, (N,), 0, 8, dtype=jnp.int32)

    ref = _circle_loss_ref(feats, labels)

    # f32 path, 2x2 grid of 128x128 pair tiles (exercises tiling + triangular skip)
    loss = jax.block_until_ready(circle_loss(feats, labels, block=128))
    assert jnp.isfinite(loss), loss
    assert jnp.allclose(loss, ref, rtol=1e-4, atol=1e-4), (loss, ref)

    # bf16 inputs exercise the fast bf16 MXU path (no wrapper upcast)
    loss_bf16 = jax.block_until_ready(
        circle_loss(feats.astype(jnp.bfloat16), labels, block=128))
    assert jnp.allclose(loss_bf16, ref, rtol=1e-3, atol=1e-3), (loss_bf16, ref)

    # non-multiple-of-tile batch exercises the padding / column-mask path
    N2 = 200
    ref2 = _circle_loss_ref(feats[:N2], labels[:N2])
    loss2 = jax.block_until_ready(circle_loss(feats[:N2], labels[:N2], block=128))
    assert jnp.allclose(loss2, ref2, rtol=1e-4, atol=1e-4), (loss2, ref2)

    # single-tile path (default block covers the whole batch)
    loss3 = jax.block_until_ready(circle_loss(feats, labels))
    assert jnp.allclose(loss3, ref, rtol=1e-4, atol=1e-4), (loss3, ref)

    print("KERNEL_OK")
</pallas_src>

<mosaic_0001>
module attributes {stable_mosaic.version = 11 : i64} {
  func.func @_circle_loss_kernel(%arg0: i32, %arg1: i32, %arg2: memref<128x64xf32, #tpu.memory_space<vmem>>, %arg3: memref<64x128xf32, #tpu.memory_space<vmem>>, %arg4: memref<128x1xi32, #tpu.memory_space<vmem>>, %arg5: memref<1x128xi32, #tpu.memory_space<vmem>>, %arg6: memref<128x1xf32, #tpu.memory_space<vmem>>, %arg7: memref<128x1xf32, #tpu.memory_space<vmem>>, %arg8: memref<128x1xf32, #tpu.memory_space<vmem>>, %arg9: memref<128x1xf32, #tpu.memory_space<vmem>>, %arg10: memref<128x1xf32, #tpu.memory_space<vmem>>, %arg11: memref<128x1xf32, #tpu.memory_space<vmem>>, %arg12: memref<128x1xf32, #tpu.memory_space<vmem>>, %arg13: memref<128x1xf32, #tpu.memory_space<vmem>>) attributes {dimension_semantics = [#tpu.dimension_semantics<parallel>, #tpu.dimension_semantics<arbitrary>], iteration_bounds = array<i64: 2, 2>, scalar_prefetch = 0 : i64, scratch_operands = 4 : i64, tpu.core_type = #tpu.core_type<tc>, window_params = [{transform_indices = @transform_0, window_bounds = array<i64: 128, 64>}, {transform_indices = @transform_1, window_bounds = array<i64: 64, 128>}, {transform_indices = @transform_2, window_bounds = array<i64: 128, 1>}, {transform_indices = @transform_3, window_bounds = array<i64: 1, 128>}, {transform_indices = @transform_4, window_bounds = array<i64: 128, 1>}, {transform_indices = @transform_5, window_bounds = array<i64: 128, 1>}, {transform_indices = @transform_6, window_bounds = array<i64: 128, 1>}, {transform_indices = @transform_7, window_bounds = array<i64: 128, 1>}]} {
    %c0_i32 = arith.constant 0 : i32
    %0 = arith.cmpi eq, %arg1, %c0_i32 : i32
    %1 = arith.extui %0 : i1 to i32
    %c0_i32_0 = arith.constant 0 : i32
    %2 = arith.cmpi ne, %1, %c0_i32_0 : i32
    scf.if %2 {
      %cst = arith.constant -1.000000e+30 : f32
      %9 = vector.broadcast %cst : f32 to vector<128x1xf32>
      %c0 = arith.constant 0 : index
      %c0_3 = arith.constant 0 : index
      %10 = vector.load %arg10[%c0, %c0_3] : memref<128x1xf32, #tpu.memory_space<vmem>>, vector<128x1xf32>
      tpu.vector_store %arg10[%c0, %c0_3], %9 {strides = array<i32>} : memref<128x1xf32, #tpu.memory_space<vmem>>, vector<128x1xf32>,
      %cst_4 = arith.constant 0.000000e+00 : f32
      %11 = vector.broadcast %cst_4 : f32 to vector<128x1xf32>
      %c0_5 = arith.constant 0 : index
      %c0_6 = arith.constant 0 : index
      %12 = vector.load %arg11[%c0_5, %c0_6] : memref<128x1xf32, #tpu.memory_space<vmem>>, vector<128x1xf32>
      tpu.vector_store %arg11[%c0_5, %c0_6], %11 {strides = array<i32>} : memref<128x1xf32, #tpu.memory_space<vmem>>, vector<128x1xf32>,
      %cst_7 = arith.constant -1.000000e+30 : f32
      %13 = vector.broadcast %cst_7 : f32 to vector<128x1xf32>
      %c0_8 = arith.constant 0 : index
      %c0_9 = arith.constant 0 : index
      %14 = vector.load %arg12[%c0_8, %c0_9] : memref<128x1xf32, #tpu.memory_space<vmem>>, vector<128x1xf32>
      tpu.vector_store %arg12[%c0_8, %c0_9], %13 {strides = array<i32>} : memref<128x1xf32, #tpu.memory_space<vmem>>, vector<128x1xf32>,
      %cst_10 = arith.constant 0.000000e+00 : f32
      %15 = vector.broadcast %cst_10 : f32 to vector<128x1xf32>
      %c0_11 = arith.constant 0 : index
      %c0_12 = arith.constant 0 : index
      %16 = vector.load %arg13[%c0_11, %c0_12] : memref<128x1xf32, #tpu.memory_space<vmem>>, vector<128x1xf32>
      tpu.vector_store %arg13[%c0_11, %c0_12], %15 {strides = array<i32>} : memref<128x1xf32, #tpu.memory_space<vmem>>, vector<128x1xf32>,
    } else {
    }
    %3 = arith.cmpi sge, %arg1, %arg0 : i32
    %4 = arith.extui %3 : i1 to i32
    %c0_i32_1 = arith.constant 0 : i32
    %5 = arith.cmpi ne, %4, %c0_i32_1 : i32
    scf.if %5 {
      %c0 = arith.constant 0 : index
      %c0_3 = arith.constant 0 : index
      %9 = vector.load %arg2[%c0, %c0_3] : memref<128x64xf32, #tpu.memory_space<vmem>>, vector<128x64xf32>
      %c0_4 = arith.constant 0 : index
      %c0_5 = arith.constant 0 : index
      %10 = vector.load %arg3[%c0_4, %c0_5] : memref<64x128xf32, #tpu.memory_space<vmem>>, vector<64x128xf32>
      %cst = arith.constant dense<0.000000e+00> : vector<128x128xf32>
      %11 = tpu.matmul %9, %10, %cst {dimension_numbers = #tpu.dot_dimension_numbers<[1], [0], [0], [1], [0, 0, 1, 1], [], []>} : vector<128x64xf32>, vector<64x128xf32>, vector<128x128xf32> -> vector<128x128xf32>
      %c128_i32 = arith.constant 128 : i32
      %12 = arith.muli %arg0, %c128_i32 : i32
      %13 = tpu.iota {dimensions = array<i32: 0>} : vector<128x128xi32>
      %14 = vector.broadcast %12 : i32 to vector<128x128xi32>
      %15 = arith.addi %14, %13 : vector<128x128xi32>
      %c128_i32_6 = arith.constant 128 : i32
      %16 = arith.muli %arg1, %c128_i32_6 : i32
      %17 = tpu.iota {dimensions = array<i32: 1>} : vector<128x128xi32>
      %18 = vector.broadcast %16 : i32 to vector<128x128xi32>
      %19 = arith.addi %18, %17 : vector<128x128xi32>
      %20 = arith.cmpi sgt, %19, %15 : vector<128x128xi32>
      %c0_7 = arith.constant 0 : index
      %c0_8 = arith.constant 0 : index
      %21 = vector.load %arg4[%c0_7, %c0_8] : memref<128x1xi32, #tpu.memory_space<vmem>>, vector<128x1xi32>
      %c0_9 = arith.constant 0 : index
      %c0_10 = arith.constant 0 : index
      %22 = vector.load %arg5[%c0_9, %c0_10] : memref<1x128xi32, #tpu.memory_space<vmem>>, vector<1x128xi32>
      %23 = vector.broadcast %21 : vector<128x1xi32> to vector<128x128xi32>
      %24 = vector.broadcast %22 : vector<1x128xi32> to vector<128x128xi32>
      %25 = arith.cmpi eq, %23, %24 : vector<128x128xi32>
      %26 = arith.andi %20, %25 : vector<128x128xi1>
      %cst_11 = arith.constant dense<true> : vector<128x128xi1>
      %27 = arith.xori %25, %cst_11 : vector<128x128xi1>
      %28 = arith.andi %20, %27 : vector<128x128xi1>
      %cst_12 = arith.constant 1.000000e+00 : f32
      %cst_13 = arith.constant 4.000000e-01 : f32
      %29 = arith.addf %cst_12, %cst_13 : f32
      %30 = vector.broadcast %29 : f32 to vector<128x128xf32>
      %31 = arith.subf %30, %11 : vector<128x128xf32>
      %cst_14 = arith.constant 0.000000e+00 : f32
      %32 = vector.broadcast %cst_14 : f32 to vector<128x128xf32>
      %33 = arith.maximumf %31, %32 : vector<128x128xf32>
      %cst_15 = arith.constant -1.280000e+02 : f32
      %34 = vector.broadcast %cst_15 : f32 to vector<128x128xf32>
      %35 = arith.mulf %34, %33 : vector<128x128xf32>
      %cst_16 = arith.constant 4.000000e-01 : f32
      %36 = vector.broadcast %cst_16 : f32 to vector<128x128xf32>
      %37 = arith.addf %11, %36 : vector<128x128xf32>
      %cst_17 = arith.constant 0.000000e+00 : f32
      %38 = vector.broadcast %cst_17 : f32 to vector<128x128xf32>
      %39 = arith.maximumf %37, %38 : vector<128x128xf32>
      %cst_18 = arith.constant 1.280000e+02 : f32
      %40 = vector.broadcast %cst_18 : f32 to vector<128x128xf32>
      %41 = arith.mulf %40, %39 : vector<128x128xf32>
      %cst_19 = arith.constant 1.000000e+00 : f32
      %cst_20 = arith.constant 4.000000e-01 : f32
      %42 = arith.subf %cst_19, %cst_20 : f32
      %43 = vector.broadcast %42 : f32 to vector<128x128xf32>
      %44 = arith.subf %11, %43 : vector<128x128xf32>
      %45 = arith.mulf %35, %44 : vector<128x128xf32>
      %cst_21 = arith.constant 4.000000e-01 : f32
      %46 = vector.broadcast %cst_21 : f32 to vector<128x128xf32>
      %47 = arith.subf %11, %46 : vector<128x128xf32>
      %48 = arith.mulf %41, %47 : vector<128x128xf32>
      %cst_22 = arith.constant -1.000000e+30 : f32
      %49 = vector.broadcast %cst_22 : f32 to vector<128x128xf32>
      %50 = arith.select %26, %45, %49 : vector<128x128xi1>, vector<128x128xf32>
      %cst_23 = arith.constant dense<0xFF800000> : vector<128xf32>
      %51 = vector.multi_reduction <maximumf>, %50, %cst_23 [1] : vector<128x128xf32> to vector<128xf32>
      %52 = vector.shape_cast %51 : vector<128xf32> to vector<128x1xf32>
      %c0_24 = arith.constant 0 : index
      %c0_25 = arith.constant 0 : index
      %53 = vector.load %arg10[%c0_24, %c0_25] : memref<128x1xf32, #tpu.memory_space<vmem>>, vector<128x1xf32>
      %54 = arith.maximumf %53, %52 : vector<128x1xf32>
      %55 = vector.broadcast %54 : vector<128x1xf32> to vector<128x128xf32>
      %56 = arith.subf %45, %55 : vector<128x128xf32>
      %57 = math.exp %56 : vector<128x128xf32>
      %cst_26 = arith.constant 0.000000e+00 : f32
      %58 = vector.broadcast %cst_26 : f32 to vector<128x128xf32>
      %59 = arith.select %26, %57, %58 : vector<128x128xi1>, vector<128x128xf32>
      %c0_27 = arith.constant 0 : index
      %c0_28 = arith.constant 0 : index
      %60 = vector.load %arg11[%c0_27, %c0_28] : memref<128x1xf32, #tpu.memory_space<vmem>>, vector<128x1xf32>
      %61 = arith.subf %53, %54 : vector<128x1xf32>
      %62 = math.exp %61 : vector<128x1xf32>
      %63 = arith.mulf %60, %62 : vector<128x1xf32>
      %cst_29 = arith.constant dense<0.000000e+00> : vector<128xf32>
      %64 = vector.multi_reduction <add>, %59, %cst_29 [1] : vector<128x128xf32> to vector<128xf32>
      %65 = vector.shape_cast %64 : vector<128xf32> to vector<128x1xf32>
      %66 = arith.addf %63, %65 : vector<128x1xf32>
      %c0_30 = arith.constant 0 : index
      %c0_31 = arith.constant 0 : index
      %67 = vector.load %arg11[%c0_30, %c0_31] : memref<128x1xf32, #tpu.memory_space<vmem>>, vector<128x1xf32>
      tpu.vector_store %arg11[%c0_30, %c0_31], %66 {strides = array<i32>} : memref<128x1xf32, #tpu.memory_space<vmem>>, vector<128x1xf32>,
      %c0_32 = arith.constant 0 : index
      %c0_33 = arith.constant 0 : index
      %68 = vector.load %arg10[%c0_32, %c0_33] : memref<128x1xf32, #tpu.memory_space<vmem>>, vector<128x1xf32>
      tpu.vector_store %arg10[%c0_32, %c0_33], %54 {strides = array<i32>} : memref<128x1xf32, #tpu.memory_space<vmem>>, vector<128x1xf32>,
      %cst_34 = arith.constant -1.000000e+30 : f32
      %69 = vector.broadcast %cst_34 : f32 to vector<128x128xf32>
      %70 = arith.select %28, %48, %69 : vector<128x128xi1>, vector<128x128xf32>
      %cst_35 = arith.constant dense<0xFF800000> : vector<128xf32>
      %71 = vector.multi_reduction <maximumf>, %70, %cst_35 [1] : vector<128x128xf32> to vector<128xf32>
      %72 = vector.shape_cast %71 : vector<128xf32> to vector<128x1xf32>
      %c0_36 = arith.constant 0 : index
      %c0_37 = arith.constant 0 : index
      %73 = vector.load %arg12[%c0_36, %c0_37] : memref<128x1xf32, #tpu.memory_space<vmem>>, vector<128x1xf32>
      %74 = arith.maximumf %73, %72 : vector<128x1xf32>
      %75 = vector.broadcast %74 : vector<128x1xf32> to vector<128x128xf32>
      %76 = arith.subf %48, %75 : vector<128x128xf32>
      %77 = math.exp %76 : vector<128x128xf32>
      %cst_38 = arith.constant 0.000000e+00 : f32
      %78 = vector.broadcast %cst_38 : f32 to vector<128x128xf32>
      %79 = arith.select %28, %77, %78 : vector<128x128xi1>, vector<128x128xf32>
      %c0_39 = arith.constant 0 : index
      %c0_40 = arith.constant 0 : index
      %80 = vector.load %arg13[%c0_39, %c0_40] : memref<128x1xf32, #tpu.memory_space<vmem>>, vector<128x1xf32>
      %81 = arith.subf %73, %74 : vector<128x1xf32>
      %82 = math.exp %81 : vector<128x1xf32>
      %83 = arith.mulf %80, %82 : vector<128x1xf32>
      %cst_41 = arith.constant dense<0.000000e+00> : vector<128xf32>
      %84 = vector.multi_reduction <add>, %79, %cst_41 [1] : vector<128x128xf32> to vector<128xf32>
      %85 = vector.shape_cast %84 : vector<128xf32> to vector<128x1xf32>
      %86 = arith.addf %83, %85 : vector<128x1xf32>
      %c0_42 = arith.constant 0 : index
      %c0_43 = arith.constant 0 : index
      %87 = vector.load %arg13[%c0_42, %c0_43] : memref<128x1xf32, #tpu.memory_space<vmem>>, vector<128x1xf32>
      tpu.vector_store %arg13[%c0_42, %c0_43], %86 {strides = array<i32>} : memref<128x1xf32, #tpu.memory_space<vmem>>, vector<128x1xf32>,
      %c0_44 = arith.constant 0 : index
      %c0_45 = arith.constant 0 : index
      %88 = vector.load %arg12[%c0_44, %c0_45] : memref<128x1xf32, #tpu.memory_space<vmem>>, vector<128x1xf32>
      tpu.vector_store %arg12[%c0_44, %c0_45], %74 {strides = array<i32>} : memref<128x1xf32, #tpu.memory_space<vmem>>, vector<128x1xf32>,
    } else {
    }
    %c1_i32 = arith.constant 1 : i32
    %6 = arith.cmpi eq, %arg1, %c1_i32 : i32
    %7 = arith.extui %6 : i1 to i32
    %c0_i32_2 = arith.constant 0 : i32
    %8 = arith.cmpi ne, %7, %c0_i32_2 : i32
    scf.if %8 {
      %c0 = arith.constant 0 : index
      %c0_3 = arith.constant 0 : index
      %9 = vector.load %arg10[%c0, %c0_3] : memref<128x1xf32, #tpu.memory_space<vmem>>, vector<128x1xf32>
      %c0_4 = arith.constant 0 : index
      %c0_5 = arith.constant 0 : index
      %10 = vector.load %arg6[%c0_4, %c0_5] : memref<128x1xf32, #tpu.memory_space<vmem>>, vector<128x1xf32>
      tpu.vector_store %arg6[%c0_4, %c0_5], %9 {strides = array<i32>} : memref<128x1xf32, #tpu.memory_space<vmem>>, vector<128x1xf32>,
      %c0_6 = arith.constant 0 : index
      %c0_7 = arith.constant 0 : index
      %11 = vector.load %arg11[%c0_6, %c0_7] : memref<128x1xf32, #tpu.memory_space<vmem>>, vector<128x1xf32>
      %c0_8 = arith.constant 0 : index
      %c0_9 = arith.constant 0 : index
      %12 = vector.load %arg7[%c0_8, %c0_9] : memref<128x1xf32, #tpu.memory_space<vmem>>, vector<128x1xf32>
      tpu.vector_store %arg7[%c0_8, %c0_9], %11 {strides = array<i32>} : memref<128x1xf32, #tpu.memory_space<vmem>>, vector<128x1xf32>,
      %c0_10 = arith.constant 0 : index
      %c0_11 = arith.constant 0 : index
      %13 = vector.load %arg12[%c0_10, %c0_11] : memref<128x1xf32, #tpu.memory_space<vmem>>, vector<128x1xf32>
      %c0_12 = arith.constant 0 : index
      %c0_13 = arith.constant 0 : index
      %14 = vector.load %arg8[%c0_12, %c0_13] : memref<128x1xf32, #tpu.memory_space<vmem>>, vector<128x1xf32>
      tpu.vector_store %arg8[%c0_12, %c0_13], %13 {strides = array<i32>} : memref<128x1xf32, #tpu.memory_space<vmem>>, vector<128x1xf32>,
      %c0_14 = arith.constant 0 : index
      %c0_15 = arith.constant 0 : index
      %15 = vector.load %arg13[%c0_14, %c0_15] : memref<128x1xf32, #tpu.memory_space<vmem>>, vector<128x1xf32>
      %c0_16 = arith.constant 0 : index
      %c0_17 = arith.constant 0 : index
      %16 = vector.load %arg9[%c0_16, %c0_17] : memref<128x1xf32, #tpu.memory_space<vmem>>, vector<128x1xf32>
      tpu.vector_store %arg9[%c0_16, %c0_17], %15 {strides = array<i32>} : memref<128x1xf32, #tpu.memory_space<vmem>>, vector<128x1xf32>,
    } else {
    }
    return
  }
  func.func @transform_0(%arg0: i32, %arg1: i32) -> (i32, i32) {
    %c0_i32 = arith.constant 0 : i32
    %c0_i32_0 = arith.constant 0 : i32
    return %arg0, %c0_i32 : i32, i32
  }
  func.func @transform_1(%arg0: i32, %arg1: i32) -> (i32, i32) {
    %c0_i32 = arith.constant 0 : i32
    %c0_i32_0 = arith.constant 0 : i32
    return %c0_i32, %arg1 : i32, i32
  }
  func.func @transform_2(%arg0: i32, %arg1: i32) -> (i32, i32) {
    %c0_i32 = arith.constant 0 : i32
    %c0_i32_0 = arith.constant 0 : i32
    return %arg0, %c0_i32 : i32, i32
  }
  func.func @transform_3(%arg0: i32, %arg1: i32) -> (i32, i32) {
    %c0_i32 = arith.constant 0 : i32
    %c0_i32_0 = arith.constant 0 : i32
    return %c0_i32, %arg1 : i32, i32
  }
  func.func @transform_4(%arg0: i32, %arg1: i32) -> (i32, i32) {
    %c0_i32 = arith.constant 0 : i32
    %c0_i32_0 = arith.constant 0 : i32
    return %arg0, %c0_i32 : i32, i32
  }
  func.func @transform_5(%arg0: i32, %arg1: i32) -> (i32, i32) {
    %c0_i32 = arith.constant 0 : i32
    %c0_i32_0 = arith.constant 0 : i32
    return %arg0, %c0_i32 : i32, i32
  }
  func.func @transform_6(%arg0: i32, %arg1: i32) -> (i32, i32) {
    %c0_i32 = arith.constant 0 : i32
    %c0_i32_0 = arith.constant 0 : i32
    return %arg0, %c0_i32 : i32, i32
  }
  func.func @transform_7(%arg0: i32, %arg1: i32) -> (i32, i32) {
    %c0_i32 = arith.constant 0 : i32
    %c0_i32_0 = arith.constant 0 : i32
    return %arg0, %c0_i32 : i32, i32
  }
}

</mosaic_0001>

<llo_original>
// kernel: tpu_custom_call.1
$region0: #{tpu_custom_call.1}
  #allocation0 [shape = 'u32[]', space=smem, size = 0x4, offset = 0x4, fixed_abs, tag = 'smem constant byte address 0x4 - core index']
  #allocation1 [shape = 'u32[144,128]{1,0:T(1,128)}', space=vmem, size = 0x12000, scoped, tag = 'internal scratch']
  #allocation2 [shape = 'f32[128,1]{1,0:T(8,128)}', space=vmem, size = 0x10000, scoped, tag = 'scratch operand']
  #allocation3 [shape = 'f32[128,1]{1,0:T(8,128)}', space=vmem, size = 0x10000, scoped, tag = 'scratch operand']
  #allocation4 [shape = 'f32[128,1]{1,0:T(8,128)}', space=vmem, size = 0x10000, scoped, tag = 'scratch operand']
  #allocation5 [shape = 'f32[128,1]{1,0:T(8,128)}', space=vmem, size = 0x10000, scoped, tag = 'scratch operand']
  %s0 = inlined_call_operand.vmem [shape: f32[256,64], index: 0, kind: input, shape index: {}]
  %s1 = inlined_call_operand.vmem [shape: f32[64,256], index: 1, kind: input, shape index: {}]
  %s2 = inlined_call_operand.vmem [shape: s32[256,1], index: 2, kind: input, shape index: {}]
  %s3 = inlined_call_operand.vmem [shape: s32[1,256], index: 3, kind: input, shape index: {}]
  %s4 = inlined_call_operand.vmem [shape: f32[256,1], index: 4, kind: output, shape index: {0}]
  %s5 = inlined_call_operand.vmem [shape: f32[256,1], index: 5, kind: output, shape index: {1}]
  %s6 = inlined_call_operand.vmem [shape: f32[256,1], index: 6, kind: output, shape index: {2}]
  %s7 = inlined_call_operand.vmem [shape: f32[256,1], index: 7, kind: output, shape index: {3}]
  %8 = xla_tuple %s4, %s5, %s6, %s7
  %s9 = sld [smem:[#allocation0]]
  $region123: #{tpu_custom_call.1} parent=0
    _
  %s11 = ssub.s32 1, %s9
  %s12 = scalar_select 0, %s11, %s9
  $region1: #{tpu_custom_call.1} parent=0
    #allocation6 [shape = 'u8[65536]{0}', space=vmem, size = 0x10000, scoped, tag = 'input window, operand 1']
    loop: start=0, step=1, limit=6
    $region2: #{tpu_custom_call.1} parent=1 // loop_pre_header
      _
    $region3: #{tpu_custom_call.1} parent=1 // loop_header
      %s14 = sphi 0, %s18
      %p15 = scmp.ge.s32.totalorder %s14, 6
      %s21 = sphi 0, %s33
      %s22 = sphi 0, %s29
      %s23 = sphi 0, %s21
      %s24 = sphi 0, %s22
      %s25 = sphi 0, %s23
      %s26 = sphi 0, %s24
      %s36 = sphi 0, %s38
      %s39 = sphi 0, %s36
      %s40 = sphi 0, %s39
      %s56 = sphi 0, %s40
      %s62 = sphi 0, %s64
      %s65 = sphi 0, %s62
      %s66 = sphi 0, %s65
      %s82 = sphi 0, %s66
      %s88 = sphi 0, %s90
      %s91 = sphi 0, %s88
      %s92 = sphi 0, %s91
      %s108 = sphi 0, %s92
      %s114 = sphi 0, %s116
      %s117 = sphi 0, %s114
      %s118 = sphi 0, %s117
      %s134 = sphi 0, %s118
      %s140 = sphi 0, %s142
      %s143 = sphi 0, %s140
      %s144 = sphi 0, %s143
      %s160 = sphi 0, %s144
      %s166 = sphi 0, %s168
      %s169 = sphi 0, %s166
      %s170 = sphi 0, %s169
      %s186 = sphi 0, %s170
      %s192 = sphi 0, %s194
      %s195 = sphi 0, %s192
      %s196 = sphi 0, %s195
      %s212 = sphi 0, %s196
      %s218 = sphi 0, %s220
      %s221 = sphi 0, %s218
      %s222 = sphi 0, %s221
      %s238 = sphi 0, %s222
    $region4: #{tpu_custom_call.1} parent=1 // loop_header_branch
      %17 = sbr.rel (%p15) target = $region8
    $region5: #{tpu_custom_call.1} parent=1 // loop_body
      %s19 = ssub.s32 %s14, 1
      %s20 = ssub.s32 %s14, 2
      %s27 = sadd.s32 1, %s22
      %p28 = scmp.ge.s32.totalorder %s27, 2
      %s29 = scalar_select %p28, 0, %s27
      %s30 = sadd.s32 1, %s21
      %s31 = scalar_select %p28, %s30, %s21
      %p32 = scmp.ge.s32.totalorder %s31, 2
      %s33 = scalar_select %p32, 0, %s31
      %s34 = ssub.s32 %s21, %s33
      %p35 = scmp.eq.s32.totalorder %s34, 0
      %s37 = sadd.s32 %s36, 1
      %s38 = scalar_select %p35, %s36, %s37
      %p41 = pneg %p35
      %p42 = scmp.eq.s32.totalorder %s14, 3
      %p43 = por %p41, %p42
      %p44 = scmp.ne.s32.totalorder %s36, %s39
      %p45 = scmp.eq.s32.totalorder %s14, 0
      %p46 = por %p44, %p45
      %p47 = scmp.ne.s32.totalorder %s36, %s39
      %p48 = scmp.eq.s32.totalorder %s19, 3
      %p49 = por %p47, %p48
      %p50 = scmp.ne.s32.totalorder %s39, %s40
      %p51 = scmp.eq.s32.totalorder %s19, 0
      %p52 = por %p50, %p51
      %p53 = scmp.ne.s32.totalorder %s39, %s40
      %p54 = scmp.eq.s32.totalorder %s20, 3
      %p55 = por %p53, %p54
      %p57 = scmp.ne.s32.totalorder %s40, %s56
      %p58 = scmp.eq.s32.totalorder %s20, 0
      %p59 = por %p57, %p58
      %s60 = ssub.s32 %s22, %s29
      %p61 = scmp.eq.s32.totalorder %s60, 0
      %s63 = sadd.s32 %s62, 1
      %s64 = scalar_select %p61, %s62, %s63
      %p67 = pneg %p61
      %p68 = scmp.eq.s32.totalorder %s14, 3
      %p69 = por %p67, %p68
      %p70 = scmp.ne.s32.totalorder %s62, %s65
      %p71 = scmp.eq.s32.totalorder %s14, 0
      %p72 = por %p70, %p71
      %p73 = scmp.ne.s32.totalorder %s62, %s65
      %p74 = scmp.eq.s32.totalorder %s19, 3
      %p75 = por %p73, %p74
      %p76 = scmp.ne.s32.totalorder %s65, %s66
      %p77 = scmp.eq.s32.totalorder %s19, 0
      %p78 = por %p76, %p77
      %p79 = scmp.ne.s32.totalorder %s65, %s66
      %p80 = scmp.eq.s32.totalorder %s20, 3
      %p81 = por %p79, %p80
      %p83 = scmp.ne.s32.totalorder %s66, %s82
      %p84 = scmp.eq.s32.totalorder %s20, 0
      %p85 = por %p83, %p84
      %s86 = ssub.s32 %s21, %s33
      %p87 = scmp.eq.s32.totalorder %s86, 0
      %s89 = sadd.s32 %s88, 1
      %s90 = scalar_select %p87, %s88, %s89
      %p93 = pneg %p87
      %p94 = scmp.eq.s32.totalorder %s14, 3
      %p95 = por %p93, %p94
      %p96 = scmp.ne.s32.totalorder %s88, %s91
      %p97 = scmp.eq.s32.totalorder %s14, 0
      %p98 = por %p96, %p97
      %p99 = scmp.ne.s32.totalorder %s88, %s91
      %p100 = scmp.eq.s32.totalorder %s19, 3
      %p101 = por %p99, %p100
      %p102 = scmp.ne.s32.totalorder %s91, %s92
      %p103 = scmp.eq.s32.totalorder %s19, 0
      %p104 = por %p102, %p103
      %p105 = scmp.ne.s32.totalorder %s91, %s92
      %p106 = scmp.eq.s32.totalorder %s20, 3
      %p107 = por %p105, %p106
      %p109 = scmp.ne.s32.totalorder %s92, %s108
      %p110 = scmp.eq.s32.totalorder %s20, 0
      %p111 = por %p109, %p110
      %s112 = ssub.s32 %s22, %s29
      %p113 = scmp.eq.s32.totalorder %s112, 0
      %s115 = sadd.s32 %s114, 1
      %s116 = scalar_select %p113, %s114, %s115
      %p119 = pneg %p113
      %p120 = scmp.eq.s32.totalorder %s14, 3
      %p121 = por %p119, %p120
      %p122 = scmp.ne.s32.totalorder %s114, %s117
      %p123 = scmp.eq.s32.totalorder %s14, 0
      %p124 = por %p122, %p123
      %p125 = scmp.ne.s32.totalorder %s114, %s117
      %p126 = scmp.eq.s32.totalorder %s19, 3
      %p127 = por %p125, %p126
      %p128 = scmp.ne.s32.totalorder %s117, %s118
      %p129 = scmp.eq.s32.totalorder %s19, 0
      %p130 = por %p128, %p129
      %p131 = scmp.ne.s32.totalorder %s117, %s118
      %p132 = scmp.eq.s32.totalorder %s20, 3
      %p133 = por %p131, %p132
      %p135 = scmp.ne.s32.totalorder %s118, %s134
      %p136 = scmp.eq.s32.totalorder %s20, 0
      %p137 = por %p135, %p136
      %s138 = ssub.s32 %s21, %s33
      %p139 = scmp.eq.s32.totalorder %s138, 0
      %s141 = sadd.s32 %s140, 1
      %s142 = scalar_select %p139, %s140, %s141
      %p145 = pneg %p139
      %p146 = scmp.eq.s32.totalorder %s14, 3
      %p147 = por %p145, %p146
      %p148 = scmp.ne.s32.totalorder %s140, %s143
      %p149 = scmp.eq.s32.totalorder %s14, 0
      %p150 = por %p148, %p149
      %p151 = scmp.ne.s32.totalorder %s140, %s143
      %p152 = scmp.eq.s32.totalorder %s19, 3
      %p153 = por %p151, %p152
      %p154 = scmp.ne.s32.totalorder %s143, %s144
      %p155 = scmp.eq.s32.totalorder %s19, 0
      %p156 = por %p154, %p155
      %p157 = scmp.ne.s32.totalorder %s143, %s144
      %p158 = scmp.eq.s32.totalorder %s20, 3
      %p159 = por %p157, %p158
      %p161 = scmp.ne.s32.totalorder %s144, %s160
      %p162 = scmp.eq.s32.totalorder %s20, 0
      %p163 = por %p161, %p162
      %s164 = ssub.s32 %s21, %s33
      %p165 = scmp.eq.s32.totalorder %s164, 0
      %s167 = sadd.s32 %s166, 1
      %s168 = scalar_select %p165, %s166, %s167
      %p171 = pneg %p165
      %p172 = scmp.eq.s32.totalorder %s14, 3
      %p173 = por %p171, %p172
      %p174 = scmp.ne.s32.totalorder %s166, %s169
      %p175 = scmp.eq.s32.totalorder %s14, 0
      %p176 = por %p174, %p175
      %p177 = scmp.ne.s32.totalorder %s166, %s169
      %p178 = scmp.eq.s32.totalorder %s19, 3
      %p179 = por %p177, %p178
      %p180 = scmp.ne.s32.totalorder %s169, %s170
      %p181 = scmp.eq.s32.totalorder %s19, 0
      %p182 = por %p180, %p181
      %p183 = scmp.ne.s32.totalorder %s169, %s170
      %p184 = scmp.eq.s32.totalorder %s20, 3
      %p185 = por %p183, %p184
      %p187 = scmp.ne.s32.totalorder %s170, %s186
      %p188 = scmp.eq.s32.totalorder %s20, 0
      %p189 = por %p187, %p188
      %s190 = ssub.s32 %s21, %s33
      %p191 = scmp.eq.s32.totalorder %s190, 0
      %s193 = sadd.s32 %s192, 1
      %s194 = scalar_select %p191, %s192, %s193
      %p197 = pneg %p191
      %p198 = scmp.eq.s32.totalorder %s14, 3
      %p199 = por %p197, %p198
      %p200 = scmp.ne.s32.totalorder %s192, %s195
      %p201 = scmp.eq.s32.totalorder %s14, 0
      %p202 = por %p200, %p201
      %p203 = scmp.ne.s32.totalorder %s192, %s195
      %p204 = scmp.eq.s32.totalorder %s19, 3
      %p205 = por %p203, %p204
      %p206 = scmp.ne.s32.totalorder %s195, %s196
      %p207 = scmp.eq.s32.totalorder %s19, 0
      %p208 = por %p206, %p207
      %p209 = scmp.ne.s32.totalorder %s195, %s196
      %p210 = scmp.eq.s32.totalorder %s20, 3
      %p211 = por %p209, %p210
      %p213 = scmp.ne.s32.totalorder %s196, %s212
      %p214 = scmp.eq.s32.totalorder %s20, 0
      %p215 = por %p213, %p214
      %s216 = ssub.s32 %s21, %s33
      %p217 = scmp.eq.s32.totalorder %s216, 0
      %s219 = sadd.s32 %s218, 1
      %s220 = scalar_select %p217, %s218, %s219
      %p223 = pneg %p217
      %p224 = scmp.eq.s32.totalorder %s14, 3
      %p225 = por %p223, %p224
      %p226 = scmp.ne.s32.totalorder %s218, %s221
      %p227 = scmp.eq.s32.totalorder %s14, 0
      %p228 = por %p226, %p227
      %p229 = scmp.ne.s32.totalorder %s218, %s221
      %p230 = scmp.eq.s32.totalorder %s19, 3
      %p231 = por %p229, %p230
      %p232 = scmp.ne.s32.totalorder %s221, %s222
      %p233 = scmp.eq.s32.totalorder %s19, 0
      %p234 = por %p232, %p233
      %p235 = scmp.ne.s32.totalorder %s221, %s222
      %p236 = scmp.eq.s32.totalorder %s20, 3
      %p237 = por %p235, %p236
      %p239 = scmp.ne.s32.totalorder %s222, %s238
      %p240 = scmp.eq.s32.totalorder %s20, 0
      %p241 = por %p239, %p240
      %p242 = scmp.le.s32.totalorder 1, %s14
      %p243 = scmp.lt.s32.totalorder %s14, 5
      %p244 = pnand %p242, %p243
      %p245 = pneg %p244
      // Predicated region
      $region9: #{tpu_custom_call.1} parent=5 // pred_check
        _
      $region10: #{tpu_custom_call.1} parent=5 // pred_check_branch
        %247 = sbr.rel (%p244) target = $region12
      $region11: #{tpu_custom_call.1} parent=5 // pred_region
        %s248 = ssub.s32 %s14, 1
      $region12: #{tpu_custom_call.1} parent=5 // pred_fallthru
        _
      %p249 = scmp.lt.s32.totalorder %s14, 4
      // Predicated region
      $region13: #{tpu_custom_call.1} parent=5 // pred_check
        %p250 = pneg %p249
      $region14: #{tpu_custom_call.1} parent=5 // pred_check_branch
        %252 = sbr.rel (%p250) target = $region16
      $region15: #{tpu_custom_call.1} parent=5 // pred_region
        // Predicated region
        $region17: #{tpu_custom_call.1} parent=15 // pred_check
          %p253 = pneg %p46
        $region18: #{tpu_custom_call.1} parent=15 // pred_check_branch
          %255 = sbr.rel (%p253) target = $region20
        $region19: #{tpu_custom_call.1} parent=15 // pred_region
          %s256 = smul.u32 16, %s21
          %p257 = scmp.lt.s32.totalorder %s256, 31
          %s258 = scalar_select %p257, %s256, 31
          %s259 = smul.addr %s258, 8
          %s260 = scalar_lea.vmem %s0, %s259
          %s261 = smul.u32 16, %s21
        $region20: #{tpu_custom_call.1} parent=15 // pred_fallthru
          _
        // Predicated region
        $region21: #{tpu_custom_call.1} parent=15 // pred_check
          %p262 = pneg %p72
        $region22: #{tpu_custom_call.1} parent=15 // pred_check_branch
          %264 = sbr.rel (%p262) target = $region24
        $region23: #{tpu_custom_call.1} parent=15 // pred_region
          %s265 = sand.u32 %s62, 1
          %s266 = sand.u32 %s62, 1
          %s267 = smul.addr %s266, 64
          %s268 = scalar_lea.vmem [#allocation6], %s267
          %s269 = smul.addr %s22, 8
          %s270 = scalar_lea.vmem %s1, %s269
          // Predicated region
          $region25: #{tpu_custom_call.1} parent=23 // pred_check
            _
          $region26: #{tpu_custom_call.1} parent=23 // pred_check_branch
            %272 = sbr.rel (0) target = $region28
          $region27: #{tpu_custom_call.1} parent=23 // pred_region
            // Predicated region
            $region29: #{tpu_custom_call.1} parent=27 // pred_check
              _
            $region30: #{tpu_custom_call.1} parent=27 // pred_check_branch
              %274 = sbr.rel (0) target = $region32
            $region31: #{tpu_custom_call.1} parent=27 // pred_region
              // Predicated region
              $region44: #{tpu_custom_call.1} parent=31 // pred_check
                _
              $region45: #{tpu_custom_call.1} parent=31 // pred_check_branch
                %303 = sbr.rel (0) target = $region47
              $region46: #{tpu_custom_call.1} parent=31 // pred_region
                loop: start=0, step=1, limit=1
                $region48: #{tpu_custom_call.1} parent=46 // loop_pre_header
                  _
                $region49: #{tpu_custom_call.1} parent=46 // loop_header
                  %s305 = sphi 0, %s309
                  %p306 = scmp.ge.s32.totalorder %s305, 1
                  %s310 = sphi %s270, %s270
                  %s311 = sphi %s268, %s268
                $region50: #{tpu_custom_call.1} parent=46 // loop_header_branch
                  %308 = sbr.rel (%p306) target = $region54
                $region51: #{tpu_custom_call.1} parent=46 // loop_body
                  %v312 = vld [vmem:[%s310] sm:$0xff]
                  %313 = vst [vmem:[%s311] sm:$0xff] %v312
                  %v314 = vld [vmem:[%s310 + $0x10] sm:$0xff]
                  %315 = vst [vmem:[%s311 + $0x8] sm:$0xff] %v314
                  %v316 = vld [vmem:[%s310 + $0x20] sm:$0xff]
                  %317 = vst [vmem:[%s311 + $0x10] sm:$0xff] %v316
                  %v318 = vld [vmem:[%s310 + $0x30] sm:$0xff]
                  %319 = vst [vmem:[%s311 + $0x18] sm:$0xff] %v318
                  %v320 = vld [vmem:[%s310 + $0x40] sm:$0xff]
                  %321 = vst [vmem:[%s311 + $0x20] sm:$0xff] %v320
                  %v322 = vld [vmem:[%s310 + $0x50] sm:$0xff]
                  %323 = vst [vmem:[%s311 + $0x28] sm:$0xff] %v322
                  %v324 = vld [vmem:[%s310 + $0x60] sm:$0xff]
                  %325 = vst [vmem:[%s311 + $0x30] sm:$0xff] %v324
                  %v326 = vld [vmem:[%s310 + $0x70] sm:$0xff]
                  %327 = vst [vmem:[%s311 + $0x38] sm:$0xff] %v326
                $region52: #{tpu_custom_call.1} parent=46 // loop_footer
                  %s309 = sadd.s32 1, %s305
                $region53: #{tpu_custom_call.1} parent=46 // loop_footer_branch
                  %304 = sbr.rel target = $region49
                $region54: #{tpu_custom_call.1} parent=46 // loop_exit
                  _
              $region47: #{tpu_custom_call.1} parent=31 // pred_fallthru
                _
              // Predicated region
              $region55: #{tpu_custom_call.1} parent=31 // pred_check
                _
              $region56: #{tpu_custom_call.1} parent=31 // pred_check_branch
                %329 = sbr.rel target = $region58
              $region57: #{tpu_custom_call.1} parent=31 // pred_region
                _
              $region58: #{tpu_custom_call.1} parent=31 // pred_fallthru
                _
            $region32: #{tpu_custom_call.1} parent=27 // pred_fallthru
              _
            // Predicated region
            $region33: #{tpu_custom_call.1} parent=27 // pred_check
              _
            $region34: #{tpu_custom_call.1} parent=27 // pred_check_branch
              %276 = sbr.rel target = $region36
            $region35: #{tpu_custom_call.1} parent=27 // pred_region
              loop: start=0, step=1, limit=1
              $region37: #{tpu_custom_call.1} parent=35 // loop_pre_header
                _
              $region38: #{tpu_custom_call.1} parent=35 // loop_header
                %s279 = sphi 0, %s283
                %p280 = scmp.ge.s32.totalorder %s279, 1
                %s284 = sphi %s270, %s270
                %s285 = sphi %s268, %s268
              $region39: #{tpu_custom_call.1} parent=35 // loop_header_branch
                %282 = sbr.rel (%p280) target = $region43
              $region40: #{tpu_custom_call.1} parent=35 // loop_body
                %v286 = vld [vmem:[%s284] sm:$0xff]
                %287 = vst [vmem:[%s285] sm:$0xff] %v286
                %v288 = vld [vmem:[%s284 + $0x10] sm:$0xff]
                %289 = vst [vmem:[%s285 + $0x8] sm:$0xff] %v288
                %v290 = vld [vmem:[%s284 + $0x20] sm:$0xff]
                %291 = vst [vmem:[%s285 + $0x10] sm:$0xff] %v290
                %v292 = vld [vmem:[%s284 + $0x30] sm:$0xff]
                %293 = vst [vmem:[%s285 + $0x18] sm:$0xff] %v292
                %v294 = vld [vmem:[%s284 + $0x40] sm:$0xff]
                %295 = vst [vmem:[%s285 + $0x20] sm:$0xff] %v294
                %v296 = vld [vmem:[%s284 + $0x50] sm:$0xff]
                %297 = vst [vmem:[%s285 + $0x28] sm:$0xff] %v296
                %v298 = vld [vmem:[%s284 + $0x60] sm:$0xff]
                %299 = vst [vmem:[%s285 + $0x30] sm:$0xff] %v298
                %v300 = vld [vmem:[%s284 + $0x70] sm:$0xff]
                %301 = vst [vmem:[%s285 + $0x38] sm:$0xff] %v300
              $region41: #{tpu_custom_call.1} parent=35 // loop_footer
                %s283 = sadd.s32 1, %s279
              $region42: #{tpu_custom_call.1} parent=35 // loop_footer_branch
                %278 = sbr.rel target = $region38
              $region43: #{tpu_custom_call.1} parent=35 // loop_exit
                _
            $region36: #{tpu_custom_call.1} parent=27 // pred_fallthru
              _
          $region28: #{tpu_custom_call.1} parent=23 // pred_fallthru
            _
          %330 = vnop
        $region24: #{tpu_custom_call.1} parent=15 // pred_fallthru
          _
        // Predicated region
        $region59: #{tpu_custom_call.1} parent=15 // pred_check
          %p331 = pneg %p98
        $region60: #{tpu_custom_call.1} parent=15 // pred_check_branch
          %333 = sbr.rel (%p331) target = $region62
        $region61: #{tpu_custom_call.1} parent=15 // pred_region
          %s334 = smul.u32 16, %s21
          %p335 = scmp.lt.s32.totalorder %s334, 31
          %s336 = scalar_select %p335, %s334, 31
          %s337 = smul.addr %s336, 8
          %s338 = scalar_lea.vmem %s2, %s337
          %s339 = smul.u32 16, %s21
        $region62: #{tpu_custom_call.1} parent=15 // pred_fallthru
          _
        // Predicated region
        $region63: #{tpu_custom_call.1} parent=15 // pred_check
          %p340 = pneg %p124
        $region64: #{tpu_custom_call.1} parent=15 // pred_check_branch
          %342 = sbr.rel (%p340) target = $region66
        $region65: #{tpu_custom_call.1} parent=15 // pred_region
          %p343 = scmp.lt.s32.totalorder %s22, 1
          %s344 = scalar_select %p343, %s22, 1
          %s345 = scalar_lea.vmem %s3, %s344
        $region66: #{tpu_custom_call.1} parent=15 // pred_fallthru
          _
      $region16: #{tpu_custom_call.1} parent=5 // pred_fallthru
        _
      %p346 = scmp.le.s32.totalorder 1, %s14
      %p347 = scmp.lt.s32.totalorder %s14, 5
      %p348 = pnand %p346, %p347
      %p349 = pneg %p348
      // Predicated region
      $region67: #{tpu_custom_call.1} parent=5 // pred_check
        _
      $region68: #{tpu_custom_call.1} parent=5 // pred_check_branch
        %351 = sbr.rel (%p348) target = $region70
      $region69: #{tpu_custom_call.1} parent=5 // pred_region
        %s352 = ssub.s32 %s14, 1
        %s353 = sand.u32 %s65, 1
        %s354 = sand.u32 %s65, 1
        %s355 = smul.addr %s354, 64
        %s356 = scalar_lea.vmem [#allocation6], %s355
        // Predicated region
        $region71: #{tpu_custom_call.1} parent=69 // pred_check
          %p357 = pneg %p78
        $region72: #{tpu_custom_call.1} parent=69 // pred_check_branch
          %359 = sbr.rel (%p357) target = $region74
        $region73: #{tpu_custom_call.1} parent=69 // pred_region
          _
        $region74: #{tpu_custom_call.1} parent=69 // pred_fallthru
          _
        %s360 = smul.u32 16, %s23
        %p361 = scmp.lt.s32.totalorder %s360, 31
        %s362 = scalar_select %p361, %s360, 31
        %s363 = smul.addr %s362, 8
        %s364 = scalar_lea.vmem %s0, %s363
        %p365 = pneg %p52
        %p366 = pneg %p49
        %s367 = sand.u32 %s65, 1
        %s368 = sand.u32 %s65, 1
        %s369 = smul.addr %s368, 64
        %s370 = scalar_lea.vmem [#allocation6], %s369
        %p371 = pneg %p78
        %p372 = pneg %p75
        %s373 = smul.u32 16, %s23
        %p374 = scmp.lt.s32.totalorder %s373, 31
        %s375 = scalar_select %p374, %s373, 31
        %s376 = smul.addr %s375, 8
        %s377 = scalar_lea.vmem %s2, %s376
        %p378 = pneg %p104
        %p379 = pneg %p101
        %p380 = scmp.lt.s32.totalorder %s24, 1
        %s381 = scalar_select %p380, %s24, 1
        %s382 = scalar_lea.vmem %s3, %s381
        %p383 = pneg %p130
        %p384 = pneg %p127
        %p385 = pneg %p156
        %p386 = pneg %p153
        %s387 = smul.u32 16, %s23
        %p388 = scmp.lt.s32.totalorder %s387, 31
        %s389 = scalar_select %p388, %s387, 31
        %s390 = smul.addr %s389, 8
        %s391 = scalar_lea.vmem %s4, %s390
        %p392 = pneg %p182
        %p393 = pneg %p179
        %s394 = smul.u32 16, %s23
        %p395 = scmp.lt.s32.totalorder %s394, 31
        %s396 = scalar_select %p395, %s394, 31
        %s397 = smul.addr %s396, 8
        %s398 = scalar_lea.vmem %s5, %s397
        %p399 = pneg %p208
        %p400 = pneg %p205
        %s401 = smul.u32 16, %s23
        %p402 = scmp.lt.s32.totalorder %s401, 31
        %s403 = scalar_select %p402, %s401, 31
        %s404 = smul.addr %s403, 8
        %s405 = scalar_lea.vmem %s6, %s404
        %p406 = pneg %p234
        %p407 = pneg %p231
        %s408 = smul.u32 16, %s23
        %p409 = scmp.lt.s32.totalorder %s408, 31
        %s410 = scalar_select %p409, %s408, 31
        %s411 = smul.addr %s410, 8
        %s412 = scalar_lea.vmem %s7, %s411
        %s413 = smul.u32 16, %s23
        %p414 = scmp.lt.s32.totalorder %s413, 31
        %s415 = scalar_select %p414, %s413, 31
        %s416 = smul.addr %s415, 8
        %s417 = scalar_lea.vmem %s0, %s416
        %s418 = smul.u32 16, %s23
        %s419 = smul.u32 16, %s23
        %p420 = scmp.lt.s32.totalorder %s419, 31
        %s421 = scalar_select %p420, %s419, 31
        %s422 = smul.addr %s421, 8
        %s423 = scalar_lea.vmem %s2, %s422
        %s424 = smul.u32 16, %s23
        %p425 = scmp.lt.s32.totalorder %s24, 1
        %s426 = scalar_select %p425, %s24, 1
        %s427 = scalar_lea.vmem %s3, %s426
        %s428 = smul.u32 16, %s23
        %p429 = scmp.lt.s32.totalorder %s428, 31
        %s430 = scalar_select %p429, %s428, 31
        %s431 = smul.addr %s430, 8
        %s432 = scalar_lea.vmem %s4, %s431
        %s433 = smul.u32 16, %s23
        %s434 = smul.u32 16, %s23
        %p435 = scmp.lt.s32.totalorder %s434, 31
        %s436 = scalar_select %p435, %s434, 31
        %s437 = smul.addr %s436, 8
        %s438 = scalar_lea.vmem %s5, %s437
        %s439 = smul.u32 16, %s23
        %s440 = smul.u32 16, %s23
        %p441 = scmp.lt.s32.totalorder %s440, 31
        %s442 = scalar_select %p441, %s440, 31
        %s443 = smul.addr %s442, 8
        %s444 = scalar_lea.vmem %s6, %s443
        %s445 = smul.u32 16, %s23
        %s446 = smul.u32 16, %s23
        %p447 = scmp.lt.s32.totalorder %s446, 31
        %s448 = scalar_select %p447, %s446, 31
        %s449 = smul.addr %s448, 8
        %s450 = scalar_lea.vmem %s7, %s449
        %s451 = smul.u32 16, %s23
        %p452 = scmp.eq.s32.totalorder %s24, 0
        // Predicated region
        $region75: #{tpu_custom_call.1} parent=69 // pred_check
          %p453 = pneg %p452
        $region76: #{tpu_custom_call.1} parent=69 // pred_check_branch
          %455 = sbr.rel (%p453) target = $region78
        $region77: #{tpu_custom_call.1} parent=69 // pred_region
          %vm456 = vcmask 7168
          %457 = vst.msk [vmem:[#allocation2] sm:$0xff] %vm456, -1e+30
          %458 = vst.msk [vmem:[#allocation2 + $0x8] sm:$0xff] %vm456, -1e+30
          %459 = vst.msk [vmem:[#allocation2 + $0x10] sm:$0xff] %vm456, -1e+30
          %460 = vst.msk [vmem:[#allocation2 + $0x18] sm:$0xff] %vm456, -1e+30
          %461 = vst.msk [vmem:[#allocation2 + $0x20] sm:$0xff] %vm456, -1e+30
          %462 = vst.msk [vmem:[#allocation2 + $0x28] sm:$0xff] %vm456, -1e+30
          %463 = vst.msk [vmem:[#allocation2 + $0x30] sm:$0xff] %vm456, -1e+30
          %464 = vst.msk [vmem:[#allocation2 + $0x38] sm:$0xff] %vm456, -1e+30
          %465 = vst.msk [vmem:[#allocation2 + $0x40] sm:$0xff] %vm456, -1e+30
          %466 = vst.msk [vmem:[#allocation2 + $0x48] sm:$0xff] %vm456, -1e+30
          %467 = vst.msk [vmem:[#allocation2 + $0x50] sm:$0xff] %vm456, -1e+30
          %468 = vst.msk [vmem:[#allocation2 + $0x58] sm:$0xff] %vm456, -1e+30
          %469 = vst.msk [vmem:[#allocation2 + $0x60] sm:$0xff] %vm456, -1e+30
          %470 = vst.msk [vmem:[#allocation2 + $0x68] sm:$0xff] %vm456, -1e+30
          %471 = vst.msk [vmem:[#allocation2 + $0x70] sm:$0xff] %vm456, -1e+30
          %472 = vst.msk [vmem:[#allocation2 + $0x78] sm:$0xff] %vm456, -1e+30
          %473 = vst.msk [vmem:[#allocation3] sm:$0xff] %vm456, 0.0
          %474 = vst.msk [vmem:[#allocation3 + $0x8] sm:$0xff] %vm456, 0.0
          %475 = vst.msk [vmem:[#allocation3 + $0x10] sm:$0xff] %vm456, 0.0
          %476 = vst.msk [vmem:[#allocation3 + $0x18] sm:$0xff] %vm456, 0.0
          %477 = vst.msk [vmem:[#allocation3 + $0x20] sm:$0xff] %vm456, 0.0
          %478 = vst.msk [vmem:[#allocation3 + $0x28] sm:$0xff] %vm456, 0.0
          %479 = vst.msk [vmem:[#allocation3 + $0x30] sm:$0xff] %vm456, 0.0
          %480 = vst.msk [vmem:[#allocation3 + $0x38] sm:$0xff] %vm456, 0.0
          %481 = vst.msk [vmem:[#allocation3 + $0x40] sm:$0xff] %vm456, 0.0
          %482 = vst.msk [vmem:[#allocation3 + $0x48] sm:$0xff] %vm456, 0.0
          %483 = vst.msk [vmem:[#allocation3 + $0x50] sm:$0xff] %vm456, 0.0
          %484 = vst.msk [vmem:[#allocation3 + $0x58] sm:$0xff] %vm456, 0.0
          %485 = vst.msk [vmem:[#allocation3 + $0x60] sm:$0xff] %vm456, 0.0
          %486 = vst.msk [vmem:[#allocation3 + $0x68] sm:$0xff] %vm456, 0.0
          %487 = vst.msk [vmem:[#allocation3 + $0x70] sm:$0xff] %vm456, 0.0
          %488 = vst.msk [vmem:[#allocation3 + $0x78] sm:$0xff] %vm456, 0.0
          %489 = vst.msk [vmem:[#allocation4] sm:$0xff] %vm456, -1e+30
          %490 = vst.msk [vmem:[#allocation4 + $0x8] sm:$0xff] %vm456, -1e+30
          %491 = vst.msk [vmem:[#allocation4 + $0x10] sm:$0xff] %vm456, -1e+30
          %492 = vst.msk [vmem:[#allocation4 + $0x18] sm:$0xff] %vm456, -1e+30
          %493 = vst.msk [vmem:[#allocation4 + $0x20] sm:$0xff] %vm456, -1e+30
          %494 = vst.msk [vmem:[#allocation4 + $0x28] sm:$0xff] %vm456, -1e+30
          %495 = vst.msk [vmem:[#allocation4 + $0x30] sm:$0xff] %vm456, -1e+30
          %496 = vst.msk [vmem:[#allocation4 + $0x38] sm:$0xff] %vm456, -1e+30
          %497 = vst.msk [vmem:[#allocation4 + $0x40] sm:$0xff] %vm456, -1e+30
          %498 = vst.msk [vmem:[#allocation4 + $0x48] sm:$0xff] %vm456, -1e+30
          %499 = vst.msk [vmem:[#allocation4 + $0x50] sm:$0xff] %vm456, -1e+30
          %500 = vst.msk [vmem:[#allocation4 + $0x58] sm:$0xff] %vm456, -1e+30
          %501 = vst.msk [vmem:[#allocation4 + $0x60] sm:$0xff] %vm456, -1e+30
          %502 = vst.msk [vmem:[#allocation4 + $0x68] sm:$0xff] %vm456, -1e+30
          %503 = vst.msk [vmem:[#allocation4 + $0x70] sm:$0xff] %vm456, -1e+30
          %504 = vst.msk [vmem:[#allocation4 + $0x78] sm:$0xff] %vm456, -1e+30
          %505 = vst.msk [vmem:[#allocation5] sm:$0xff] %vm456, 0.0
          %506 = vst.msk [vmem:[#allocation5 + $0x8] sm:$0xff] %vm456, 0.0
          %507 = vst.msk [vmem:[#allocation5 + $0x10] sm:$0xff] %vm456, 0.0
          %508 = vst.msk [vmem:[#allocation5 + $0x18] sm:$0xff] %vm456, 0.0
          %509 = vst.msk [vmem:[#allocation5 + $0x20] sm:$0xff] %vm456, 0.0
          %510 = vst.msk [vmem:[#allocation5 + $0x28] sm:$0xff] %vm456, 0.0
          %511 = vst.msk [vmem:[#allocation5 + $0x30] sm:$0xff] %vm456, 0.0
          %512 = vst.msk [vmem:[#allocation5 + $0x38] sm:$0xff] %vm456, 0.0
          %513 = vst.msk [vmem:[#allocation5 + $0x40] sm:$0xff] %vm456, 0.0
          %514 = vst.msk [vmem:[#allocation5 + $0x48] sm:$0xff] %vm456, 0.0
          %515 = vst.msk [vmem:[#allocation5 + $0x50] sm:$0xff] %vm456, 0.0
          %516 = vst.msk [vmem:[#allocation5 + $0x58] sm:$0xff] %vm456, 0.0
          %517 = vst.msk [vmem:[#allocation5 + $0x60] sm:$0xff] %vm456, 0.0
          %518 = vst.msk [vmem:[#allocation5 + $0x68] sm:$0xff] %vm456, 0.0
          %519 = vst.msk [vmem:[#allocation5 + $0x70] sm:$0xff] %vm456, 0.0
          %520 = vst.msk [vmem:[#allocation5 + $0x78] sm:$0xff] %vm456, 0.0
        $region78: #{tpu_custom_call.1} parent=69 // pred_fallthru
          _
        %p521 = scmp.ge.s32.totalorder %s24, %s23
        // Predicated region
        $region79: #{tpu_custom_call.1} parent=69 // pred_check
          %p522 = pneg %p521
        $region80: #{tpu_custom_call.1} parent=69 // pred_check_branch
          %524 = sbr.rel (%p522) target = $region82
        $region81: #{tpu_custom_call.1} parent=69 // pred_region
          %v525 = vld [vmem:[%s417] sm:$0xff]
          %v526 = vld [vmem:[%s417 + $0x8] sm:$0xff]
          %v527 = vld [vmem:[%s417 + $0x10] sm:$0xff]
          %v528 = vld [vmem:[%s417 + $0x18] sm:$0xff]
          %v529 = vld [vmem:[%s417 + $0x20] sm:$0xff]
          %v530 = vld [vmem:[%s417 + $0x28] sm:$0xff]
          %v531 = vld [vmem:[%s417 + $0x30] sm:$0xff]
          %v532 = vld [vmem:[%s417 + $0x38] sm:$0xff]
          %v533 = vld [vmem:[%s417 + $0x40] sm:$0xff]
          %v534 = vld [vmem:[%s417 + $0x48] sm:$0xff]
          %v535 = vld [vmem:[%s417 + $0x50] sm:$0xff]
          %v536 = vld [vmem:[%s417 + $0x58] sm:$0xff]
          %v537 = vld [vmem:[%s417 + $0x60] sm:$0xff]
          %v538 = vld [vmem:[%s417 + $0x68] sm:$0xff]
          %v539 = vld [vmem:[%s417 + $0x70] sm:$0xff]
          %v540 = vld [vmem:[%s417 + $0x78] sm:$0xff]
          %v541 = vld [vmem:[%s356] sm:$0xff]
          %v542 = vld [vmem:[%s356 + $0x8] sm:$0xff]
          %v543 = vld [vmem:[%s356 + $0x10] sm:$0xff]
          %v544 = vld [vmem:[%s356 + $0x18] sm:$0xff]
          %v545 = vld [vmem:[%s356 + $0x20] sm:$0xff]
          %v546 = vld [vmem:[%s356 + $0x28] sm:$0xff]
          %v547 = vld [vmem:[%s356 + $0x30] sm:$0xff]
          %v548 = vld [vmem:[%s356 + $0x38] sm:$0xff]
          %vm549 = vcmask 523264
          %v551 = vsel %vm549, %v525, 0
          %v554 = vsel %vm549, %v526, 0
          %v557 = vsel %vm549, %v527, 0
          %v560 = vsel %vm549, %v528, 0
          %v563 = vsel %vm549, %v529, 0
          %v566 = vsel %vm549, %v530, 0
          %v569 = vsel %vm549, %v531, 0
          %v572 = vsel %vm549, %v532, 0
          %v575 = vsel %vm549, %v533, 0
          %v578 = vsel %vm549, %v534, 0
          %v581 = vsel %vm549, %v535, 0
          %v584 = vsel %vm549, %v536, 0
          %v587 = vsel %vm549, %v537, 0
          %v590 = vsel %vm549, %v538, 0
          %v593 = vsel %vm549, %v539, 0
          %v596 = vsel %vm549, %v540, 0
          %598 = vmatprep.subr.mxu0 0.0
          %599 = vmatpush1.msra.mxu0 %v541
          %600 = vmatprep.subr.mxu0 0.0
          %601 = vmatpush1.msra.mxu0 %v542
          %602 = vmatprep.subr.mxu0 0.0
          %603 = vmatpush1.msra.mxu0 %v543
          %604 = vmatprep.subr.mxu0 0.0
          %605 = vmatpush1.msra.mxu0 %v544
          %606 = vmatprep.subr.mxu0 0.0
          %607 = vmatpush1.msra.mxu0 %v545
          %608 = vmatprep.subr.mxu0 0.0
          %609 = vmatpush1.msra.mxu0 %v546
          %610 = vmatprep.subr.mxu0 0.0
          %611 = vmatpush1.msra.mxu0 %v547
          %612 = vmatprep.subr.mxu0 0.0
          %613 = vmatpush1.msra.mxu0 %v548
          %614 = vmatprep.subr.mxu0 0.0
          %615 = vmatpush1.msra.mxu0 0.0
          %616 = vmatprep.subr.mxu0 0.0
          %617 = vmatpush1.msra.mxu0 0.0
          %618 = vmatprep.subr.mxu0 0.0
          %619 = vmatpush1.msra.mxu0 0.0
          %620 = vmatprep.subr.mxu0 0.0
          %621 = vmatpush1.msra.mxu0 0.0
          %622 = vmatprep.subr.mxu0 0.0
          %623 = vmatpush1.msra.mxu0 0.0
          %624 = vmatprep.subr.mxu0 0.0
          %625 = vmatpush1.msra.mxu0 0.0
          %626 = vmatprep.subr.mxu0 0.0
          %627 = vmatpush1.msra.mxu0 0.0
          %628 = vmatprep.subr.mxu0 0.0
          %629 = vmatpush1.msra.mxu0 0.0
          %630 = vmatprep.subr.mxu0 0.0
          %631 = vmatpush1.msra.mxu0 0.0
          %632 = vmatprep.subr.mxu0 0.0
          %633 = vmatpush1.msra.mxu0 0.0
          %634 = vmatprep.subr.mxu0 0.0
          %635 = vmatpush1.msra.mxu0 0.0
          %636 = vmatprep.subr.mxu0 0.0
          %637 = vmatpush1.msra.mxu0 0.0
          %638 = vmatprep.subr.mxu0 0.0
          %639 = vmatpush1.msra.mxu0 0.0
          %640 = vmatprep.subr.mxu0 0.0
          %641 = vmatpush1.msra.mxu0 0.0
          %642 = vmatprep.subr.mxu0 0.0
          %643 = vmatpush1.msra.mxu0 0.0
          %644 = vmatprep.subr.mxu0 0.0
          %645 = vmatpush1.msra.mxu0 0.0
          %646 = vmatprep.subr.mxu0 0.0
          %647 = vmatpush1.msra.mxu0 0.0
          %648 = vmatprep.subr.mxu0 0.0
          %649 = vmatpush1.msra.mxu0 0.0
          %650 = vmatprep.subr.mxu0 0.0
          %651 = vmatpush1.msra.mxu0 0.0
          %652 = vmatprep.subr.mxu0 0.0
          %653 = vmatpush1.msra.mxu0 0.0
          %654 = vmatprep.subr.mxu0 0.0
          %655 = vmatpush1.msra.mxu0 0.0
          %656 = vmatprep.subr.mxu0 0.0
          %657 = vmatpush1.msra.mxu0 0.0
          %658 = vmatprep.subr.mxu0 0.0
          %659 = vmatpush1.msra.mxu0 0.0
          %660 = vmatprep.subr.mxu0 0.0
          %661 = vmatpush1.msra.mxu0 0.0
          %662 = vmatprep.mubr.f32.mxu0 0.0
          %663 = vmatmul.mubr.f32.gmra.mrb[0].mxu0 %v551
          %v664 = vpop.f32.mrb[0].mxu0
          %v665 = vadd.f32 0.0, %v664
          %v666 = vpop.f32.mrb[0].mxu0
          %667 = vmatprep.mubr.f32.mxu0 0.0
          %668 = vmatmul.mubr.f32.gmra.mrb[0].mxu0 %v554
          %v669 = vpop.f32.mrb[0].mxu0
          %v670 = vadd.f32 0.0, %v669
          %v671 = vpop.f32.mrb[0].mxu0
          %672 = vmatprep.mubr.f32.mxu0 0.0
          %673 = vmatmul.mubr.f32.gmra.mrb[0].mxu0 %v557
          %v674 = vpop.f32.mrb[0].mxu0
          %v675 = vadd.f32 0.0, %v674
          %v676 = vpop.f32.mrb[0].mxu0
          %677 = vmatprep.mubr.f32.mxu0 0.0
          %678 = vmatmul.mubr.f32.gmra.mrb[0].mxu0 %v560
          %v679 = vpop.f32.mrb[0].mxu0
          %v680 = vadd.f32 0.0, %v679
          %v681 = vpop.f32.mrb[0].mxu0
          %682 = vmatprep.mubr.f32.mxu0 0.0
          %683 = vmatmul.mubr.f32.gmra.mrb[0].mxu0 %v563
          %v684 = vpop.f32.mrb[0].mxu0
          %v685 = vadd.f32 0.0, %v684
          %v686 = vpop.f32.mrb[0].mxu0
          %687 = vmatprep.mubr.f32.mxu0 0.0
          %688 = vmatmul.mubr.f32.gmra.mrb[0].mxu0 %v566
          %v689 = vpop.f32.mrb[0].mxu0
          %v690 = vadd.f32 0.0, %v689
          %v691 = vpop.f32.mrb[0].mxu0
          %692 = vmatprep.mubr.f32.mxu0 0.0
          %693 = vmatmul.mubr.f32.gmra.mrb[0].mxu0 %v569
          %v694 = vpop.f32.mrb[0].mxu0
          %v695 = vadd.f32 0.0, %v694
          %v696 = vpop.f32.mrb[0].mxu0
          %697 = vmatprep.mubr.f32.mxu0 0.0
          %698 = vmatmul.mubr.f32.gmra.mrb[0].mxu0 %v572
          %v699 = vpop.f32.mrb[0].mxu0
          %v700 = vadd.f32 0.0, %v699
          %v701 = vpop.f32.mrb[0].mxu0
          %702 = vmatprep.mubr.f32.mxu0 0.0
          %703 = vmatmul.mubr.f32.gmra.mrb[0].mxu0 %v575
          %v704 = vpop.f32.mrb[0].mxu0
          %v705 = vadd.f32 0.0, %v704
          %v706 = vpop.f32.mrb[0].mxu0
          %707 = vmatprep.mubr.f32.mxu0 0.0
          %708 = vmatmul.mubr.f32.gmra.mrb[0].mxu0 %v578
          %v709 = vpop.f32.mrb[0].mxu0
          %v710 = vadd.f32 0.0, %v709
          %v711 = vpop.f32.mrb[0].mxu0
          %712 = vmatprep.mubr.f32.mxu0 0.0
          %713 = vmatmul.mubr.f32.gmra.mrb[0].mxu0 %v581
          %v714 = vpop.f32.mrb[0].mxu0
          %v715 = vadd.f32 0.0, %v714
          %v716 = vpop.f32.mrb[0].mxu0
          %717 = vmatprep.mubr.f32.mxu0 0.0
          %718 = vmatmul.mubr.f32.gmra.mrb[0].mxu0 %v584
          %v719 = vpop.f32.mrb[0].mxu0
          %v720 = vadd.f32 0.0, %v719
          %v721 = vpop.f32.mrb[0].mxu0
          %722 = vmatprep.mubr.f32.mxu0 0.0
          %723 = vmatmul.mubr.f32.gmra.mrb[0].mxu0 %v587
          %v724 = vpop.f32.mrb[0].mxu0
          %v725 = vadd.f32 0.0, %v724
          %v726 = vpop.f32.mrb[0].mxu0
          %727 = vmatprep.mubr.f32.mxu0 0.0
          %728 = vmatmul.mubr.f32.gmra.mrb[0].mxu0 %v590
          %v729 = vpop.f32.mrb[0].mxu0
          %v730 = vadd.f32 0.0, %v729
          %v731 = vpop.f32.mrb[0].mxu0
          %732 = vmatprep.mubr.f32.mxu0 0.0
          %733 = vmatmul.mubr.f32.gmra.mrb[0].mxu0 %v593
          %v734 = vpop.f32.mrb[0].mxu0
          %v735 = vadd.f32 0.0, %v734
          %v736 = vpop.f32.mrb[0].mxu0
          %737 = vmatprep.mubr.f32.mxu0 0.0
          %738 = vmatmul.mubr.f32.gmra.mrb[0].mxu0 %v596
          %v739 = vpop.f32.mrb[0].mxu0
          %v740 = vadd.f32 0.0, %v739
          %v741 = vpop.f32.mrb[0].mxu0
          %742 = vdwg.mxu0
          %s743 = smul.u32 %s23, 128
          %v744 = vlaneseq
          %v745 = vshrl.u32 %v744, 7
          %v746 = vadd.s32 %v745, 8
          %v747 = vadd.s32 %v745, 16
          %v748 = vadd.s32 %v745, 24
          %v749 = vadd.s32 %v745, 32
          %v750 = vadd.s32 %v745, 40
          %v751 = vadd.s32 %v745, 48
          %v752 = vadd.s32 %v745, 56
          %v753 = vadd.s32 %v745, 64
          %v754 = vadd.s32 %v745, 72
          %v755 = vadd.s32 %v745, 80
          %v756 = vadd.s32 %v745, 88
          %v757 = vadd.s32 %v745, 96
          %v758 = vadd.s32 %v745, 104
          %v759 = vadd.s32 %v745, 112
          %v760 = vadd.s32 %v745, 120
          %v761 = vstv %s743
          %v762 = vadd.s32 %v761, %v745
          %v763 = vadd.s32 %v761, %v746
          %v764 = vadd.s32 %v761, %v747
          %v765 = vadd.s32 %v761, %v748
          %v766 = vadd.s32 %v761, %v749
          %v767 = vadd.s32 %v761, %v750
          %v768 = vadd.s32 %v761, %v751
          %v769 = vadd.s32 %v761, %v752
          %v770 = vadd.s32 %v761, %v753
          %v771 = vadd.s32 %v761, %v754
          %v772 = vadd.s32 %v761, %v755
          %v773 = vadd.s32 %v761, %v756
          %v774 = vadd.s32 %v761, %v757
          %v775 = vadd.s32 %v761, %v758
          %v776 = vadd.s32 %v761, %v759
          %v777 = vadd.s32 %v761, %v760
          %s778 = smul.u32 %s24, 128
          %v779 = vlaneseq
          %v780 = vand.u32 %v779, 127
          %v781 = vstv %s778
          %v782 = vadd.s32 %v781, %v780
          %vm783 = vcmp.gt.s32.totalorder %v782, %v762
          %vm784 = vcmp.gt.s32.totalorder %v782, %v763
          %vm785 = vcmp.gt.s32.totalorder %v782, %v764
          %vm786 = vcmp.gt.s32.totalorder %v782, %v765
          %vm787 = vcmp.gt.s32.totalorder %v782, %v766
          %vm788 = vcmp.gt.s32.totalorder %v782, %v767
          %vm789 = vcmp.gt.s32.totalorder %v782, %v768
          %vm790 = vcmp.gt.s32.totalorder %v782, %v769
          %vm791 = vcmp.gt.s32.totalorder %v782, %v770
          %vm792 = vcmp.gt.s32.totalorder %v782, %v771
          %vm793 = vcmp.gt.s32.totalorder %v782, %v772
          %vm794 = vcmp.gt.s32.totalorder %v782, %v773
          %vm795 = vcmp.gt.s32.totalorder %v782, %v774
          %vm796 = vcmp.gt.s32.totalorder %v782, %v775
          %vm797 = vcmp.gt.s32.totalorder %v782, %v776
          %vm798 = vcmp.gt.s32.totalorder %v782, %v777
          %v799 = vld [vmem:[%s423] sm:$0xff]
          %v800 = vld [vmem:[%s423 + $0x8] sm:$0xff]
          %v801 = vld [vmem:[%s423 + $0x10] sm:$0xff]
          %v802 = vld [vmem:[%s423 + $0x18] sm:$0xff]
          %v803 = vld [vmem:[%s423 + $0x20] sm:$0xff]
          %v804 = vld [vmem:[%s423 + $0x28] sm:$0xff]
          %v805 = vld [vmem:[%s423 + $0x30] sm:$0xff]
          %v806 = vld [vmem:[%s423 + $0x38] sm:$0xff]
          %v807 = vld [vmem:[%s423 + $0x40] sm:$0xff]
          %v808 = vld [vmem:[%s423 + $0x48] sm:$0xff]
          %v809 = vld [vmem:[%s423 + $0x50] sm:$0xff]
          %v810 = vld [vmem:[%s423 + $0x58] sm:$0xff]
          %v811 = vld [vmem:[%s423 + $0x60] sm:$0xff]
          %v812 = vld [vmem:[%s423 + $0x68] sm:$0xff]
          %v813 = vld [vmem:[%s423 + $0x70] sm:$0xff]
          %v814 = vld [vmem:[%s423 + $0x78] sm:$0xff]
          %v815 = vld [vmem:[%s427] sm:$0x1]
          %816 = vset.pattern.permute.xlu0 0
          %817 = vperm.xlu0 %816, %v799
          %v818 = vpop.permute.xlu0 %817
          %819 = vset.pattern.permute.xlu0 0
          %820 = vperm.xlu0 %819, %v800
          %v821 = vpop.permute.xlu0 %820
          %822 = vset.pattern.permute.xlu0 0
          %823 = vperm.xlu0 %822, %v801
          %v824 = vpop.permute.xlu0 %823
          %825 = vset.pattern.permute.xlu0 0
          %826 = vperm.xlu0 %825, %v802
          %v827 = vpop.permute.xlu0 %826
          %828 = vset.pattern.permute.xlu0 0
          %829 = vperm.xlu0 %828, %v803
          %v830 = vpop.permute.xlu0 %829
          %831 = vset.pattern.permute.xlu0 0
          %832 = vperm.xlu0 %831, %v804
          %v833 = vpop.permute.xlu0 %832
          %834 = vset.pattern.permute.xlu0 0
          %835 = vperm.xlu0 %834, %v805
          %v836 = vpop.permute.xlu0 %835
          %837 = vset.pattern.permute.xlu0 0
          %838 = vperm.xlu0 %837, %v806
          %v839 = vpop.permute.xlu0 %838
          %840 = vset.pattern.permute.xlu0 0
          %841 = vperm.xlu0 %840, %v807
          %v842 = vpop.permute.xlu0 %841
          %843 = vset.pattern.permute.xlu0 0
          %844 = vperm.xlu0 %843, %v808
          %v845 = vpop.permute.xlu0 %844
          %846 = vset.pattern.permute.xlu0 0
          %847 = vperm.xlu0 %846, %v809
          %v848 = vpop.permute.xlu0 %847
          %849 = vset.pattern.permute.xlu0 0
          %850 = vperm.xlu0 %849, %v810
          %v851 = vpop.permute.xlu0 %850
          %852 = vset.pattern.permute.xlu0 0
          %853 = vperm.xlu0 %852, %v811
          %v854 = vpop.permute.xlu0 %853
          %855 = vset.pattern.permute.xlu0 0
          %856 = vperm.xlu0 %855, %v812
          %v857 = vpop.permute.xlu0 %856
          %858 = vset.pattern.permute.xlu0 0
          %859 = vperm.xlu0 %858, %v813
          %v860 = vpop.permute.xlu0 %859
          %861 = vset.pattern.permute.xlu0 0
          %862 = vperm.xlu0 %861, %v814
          %v863 = vpop.permute.xlu0 %862
          %v864 = vlaneseq
          %v865 = vshrl.u32 %v864, 7
          %v866 = vsub.s32 0, %v865
          %v867 = vrot.slane %v815, %v866
          %vm868 = vcmp.eq.s32.totalorder %v818, %v867
          %vm869 = vcmp.eq.s32.totalorder %v821, %v867
          %vm870 = vcmp.eq.s32.totalorder %v824, %v867
          %vm871 = vcmp.eq.s32.totalorder %v827, %v867
          %vm872 = vcmp.eq.s32.totalorder %v830, %v867
          %vm873 = vcmp.eq.s32.totalorder %v833, %v867
          %vm874 = vcmp.eq.s32.totalorder %v836, %v867
          %vm875 = vcmp.eq.s32.totalorder %v839, %v867
          %vm876 = vcmp.eq.s32.totalorder %v842, %v867
          %vm877 = vcmp.eq.s32.totalorder %v845, %v867
          %vm878 = vcmp.eq.s32.totalorder %v848, %v867
          %vm879 = vcmp.eq.s32.totalorder %v851, %v867
          %vm880 = vcmp.eq.s32.totalorder %v854, %v867
          %vm881 = vcmp.eq.s32.totalorder %v857, %v867
          %vm882 = vcmp.eq.s32.totalorder %v860, %v867
          %vm883 = vcmp.eq.s32.totalorder %v863, %v867
          %vm884 = vmand %vm783, %vm868
          %vm885 = vmand %vm784, %vm869
          %vm886 = vmand %vm785, %vm870
          %vm887 = vmand %vm786, %vm871
          %vm888 = vmand %vm787, %vm872
          %vm889 = vmand %vm788, %vm873
          %vm890 = vmand %vm789, %vm874
          %vm891 = vmand %vm790, %vm875
          %vm892 = vmand %vm791, %vm876
          %vm893 = vmand %vm792, %vm877
          %vm894 = vmand %vm793, %vm878
          %vm895 = vmand %vm794, %vm879
          %vm896 = vmand %vm795, %vm880
          %vm897 = vmand %vm796, %vm881
          %vm898 = vmand %vm797, %vm882
          %vm899 = vmand %vm798, %vm883
          %vm900 = vmxor %vm868, 1
          %vm901 = vmxor %vm869, 1
          %vm902 = vmxor %vm870, 1
          %vm903 = vmxor %vm871, 1
          %vm904 = vmxor %vm872, 1
          %vm905 = vmxor %vm873, 1
          %vm906 = vmxor %vm874, 1
          %vm907 = vmxor %vm875, 1
          %vm908 = vmxor %vm876, 1
          %vm909 = vmxor %vm877, 1
          %vm910 = vmxor %vm878, 1
          %vm911 = vmxor %vm879, 1
          %vm912 = vmxor %vm880, 1
          %vm913 = vmxor %vm881, 1
          %vm914 = vmxor %vm882, 1
          %vm915 = vmxor %vm883, 1
          %vm916 = vmand %vm783, %vm900
          %vm917 = vmand %vm784, %vm901
          %vm918 = vmand %vm785, %vm902
          %vm919 = vmand %vm786, %vm903
          %vm920 = vmand %vm787, %vm904
          %vm921 = vmand %vm788, %vm905
          %vm922 = vmand %vm789, %vm906
          %vm923 = vmand %vm790, %vm907
          %vm924 = vmand %vm791, %vm908
          %vm925 = vmand %vm792, %vm909
          %vm926 = vmand %vm793, %vm910
          %vm927 = vmand %vm794, %vm911
          %vm928 = vmand %vm795, %vm912
          %vm929 = vmand %vm796, %vm913
          %vm930 = vmand %vm797, %vm914
          %vm931 = vmand %vm798, %vm915
          %v932 = vsub.f32 1.4, %v665
          %v933 = vsub.f32 1.4, %v670
          %v934 = vsub.f32 1.4, %v675
          %v935 = vsub.f32 1.4, %v680
          %v936 = vsub.f32 1.4, %v685
          %v937 = vsub.f32 1.4, %v690
          %v938 = vsub.f32 1.4, %v695
          %v939 = vsub.f32 1.4, %v700
          %v940 = vsub.f32 1.4, %v705
          %v941 = vsub.f32 1.4, %v710
          %v942 = vsub.f32 1.4, %v715
          %v943 = vsub.f32 1.4, %v720
          %v944 = vsub.f32 1.4, %v725
          %v945 = vsub.f32 1.4, %v730
          %v946 = vsub.f32 1.4, %v735
          %v947 = vsub.f32 1.4, %v740
          %v948 = vmax.f32 %v932, 0.0
          %v949 = vmax.f32 %v933, 0.0
          %v950 = vmax.f32 %v934, 0.0
          %v951 = vmax.f32 %v935, 0.0
          %v952 = vmax.f32 %v936, 0.0
          %v953 = vmax.f32 %v937, 0.0
          %v954 = vmax.f32 %v938, 0.0
          %v955 = vmax.f32 %v939, 0.0
          %v956 = vmax.f32 %v940, 0.0
          %v957 = vmax.f32 %v941, 0.0
          %v958 = vmax.f32 %v942, 0.0
          %v959 = vmax.f32 %v943, 0.0
          %v960 = vmax.f32 %v944, 0.0
          %v961 = vmax.f32 %v945, 0.0
          %v962 = vmax.f32 %v946, 0.0
          %v963 = vmax.f32 %v947, 0.0
          %v964 = vmul.f32 %v948, -128.0
          %v965 = vmul.f32 %v949, -128.0
          %v966 = vmul.f32 %v950, -128.0
          %v967 = vmul.f32 %v951, -128.0
          %v968 = vmul.f32 %v952, -128.0
          %v969 = vmul.f32 %v953, -128.0
          %v970 = vmul.f32 %v954, -128.0
          %v971 = vmul.f32 %v955, -128.0
          %v972 = vmul.f32 %v956, -128.0
          %v973 = vmul.f32 %v957, -128.0
          %v974 = vmul.f32 %v958, -128.0
          %v975 = vmul.f32 %v959, -128.0
          %v976 = vmul.f32 %v960, -128.0
          %v977 = vmul.f32 %v961, -128.0
          %v978 = vmul.f32 %v962, -128.0
          %v979 = vmul.f32 %v963, -128.0
          %v980 = vadd.f32 %v665, 0.4
          %v981 = vadd.f32 %v670, 0.4
          %v982 = vadd.f32 %v675, 0.4
          %v983 = vadd.f32 %v680, 0.4
          %v984 = vadd.f32 %v685, 0.4
          %v985 = vadd.f32 %v690, 0.4
          %v986 = vadd.f32 %v695, 0.4
          %v987 = vadd.f32 %v700, 0.4
          %v988 = vadd.f32 %v705, 0.4
          %v989 = vadd.f32 %v710, 0.4
          %v990 = vadd.f32 %v715, 0.4
          %v991 = vadd.f32 %v720, 0.4
          %v992 = vadd.f32 %v725, 0.4
          %v993 = vadd.f32 %v730, 0.4
          %v994 = vadd.f32 %v735, 0.4
          %v995 = vadd.f32 %v740, 0.4
          %v996 = vmax.f32 %v980, 0.0
          %v997 = vmax.f32 %v981, 0.0
          %v998 = vmax.f32 %v982, 0.0
          %v999 = vmax.f32 %v983, 0.0
          %v1000 = vmax.f32 %v984, 0.0
          %v1001 = vmax.f32 %v985, 0.0
          %v1002 = vmax.f32 %v986, 0.0
          %v1003 = vmax.f32 %v987, 0.0
          %v1004 = vmax.f32 %v988, 0.0
          %v1005 = vmax.f32 %v989, 0.0
          %v1006 = vmax.f32 %v990, 0.0
          %v1007 = vmax.f32 %v991, 0.0
          %v1008 = vmax.f32 %v992, 0.0
          %v1009 = vmax.f32 %v993, 0.0
          %v1010 = vmax.f32 %v994, 0.0
          %v1011 = vmax.f32 %v995, 0.0
          %v1012 = vmul.f32 %v996, 128.0
          %v1013 = vmul.f32 %v997, 128.0
          %v1014 = vmul.f32 %v998, 128.0
          %v1015 = vmul.f32 %v999, 128.0
          %v1016 = vmul.f32 %v1000, 128.0
          %v1017 = vmul.f32 %v1001, 128.0
          %v1018 = vmul.f32 %v1002, 128.0
          %v1019 = vmul.f32 %v1003, 128.0
          %v1020 = vmul.f32 %v1004, 128.0
          %v1021 = vmul.f32 %v1005, 128.0
          %v1022 = vmul.f32 %v1006, 128.0
          %v1023 = vmul.f32 %v1007, 128.0
          %v1024 = vmul.f32 %v1008, 128.0
          %v1025 = vmul.f32 %v1009, 128.0
          %v1026 = vmul.f32 %v1010, 128.0
          %v1027 = vmul.f32 %v1011, 128.0
          %v1028 = vsub.f32 %v665, 0.6
          %v1029 = vsub.f32 %v670, 0.6
          %v1030 = vsub.f32 %v675, 0.6
          %v1031 = vsub.f32 %v680, 0.6
          %v1032 = vsub.f32 %v685, 0.6
          %v1033 = vsub.f32 %v690, 0.6
          %v1034 = vsub.f32 %v695, 0.6
          %v1035 = vsub.f32 %v700, 0.6
          %v1036 = vsub.f32 %v705, 0.6
          %v1037 = vsub.f32 %v710, 0.6
          %v1038 = vsub.f32 %v715, 0.6
          %v1039 = vsub.f32 %v720, 0.6
          %v1040 = vsub.f32 %v725, 0.6
          %v1041 = vsub.f32 %v730, 0.6
          %v1042 = vsub.f32 %v735, 0.6
          %v1043 = vsub.f32 %v740, 0.6
          %v1044 = vmul.f32 %v964, %v1028
          %v1045 = vmul.f32 %v965, %v1029
          %v1046 = vmul.f32 %v966, %v1030
          %v1047 = vmul.f32 %v967, %v1031
          %v1048 = vmul.f32 %v968, %v1032
          %v1049 = vmul.f32 %v969, %v1033
          %v1050 = vmul.f32 %v970, %v1034
          %v1051 = vmul.f32 %v971, %v1035
          %v1052 = vmul.f32 %v972, %v1036
          %v1053 = vmul.f32 %v973, %v1037
          %v1054 = vmul.f32 %v974, %v1038
          %v1055 = vmul.f32 %v975, %v1039
          %v1056 = vmul.f32 %v976, %v1040
          %v1057 = vmul.f32 %v977, %v1041
          %v1058 = vmul.f32 %v978, %v1042
          %v1059 = vmul.f32 %v979, %v1043
          %v1060 = vsub.f32 %v665, 0.4
          %v1061 = vsub.f32 %v670, 0.4
          %v1062 = vsub.f32 %v675, 0.4
          %v1063 = vsub.f32 %v680, 0.4
          %v1064 = vsub.f32 %v685, 0.4
          %v1065 = vsub.f32 %v690, 0.4
          %v1066 = vsub.f32 %v695, 0.4
          %v1067 = vsub.f32 %v700, 0.4
          %v1068 = vsub.f32 %v705, 0.4
          %v1069 = vsub.f32 %v710, 0.4
          %v1070 = vsub.f32 %v715, 0.4
          %v1071 = vsub.f32 %v720, 0.4
          %v1072 = vsub.f32 %v725, 0.4
          %v1073 = vsub.f32 %v730, 0.4
          %v1074 = vsub.f32 %v735, 0.4
          %v1075 = vsub.f32 %v740, 0.4
          %v1076 = vmul.f32 %v1012, %v1060
          %v1077 = vmul.f32 %v1013, %v1061
          %v1078 = vmul.f32 %v1014, %v1062
          %v1079 = vmul.f32 %v1015, %v1063
          %v1080 = vmul.f32 %v1016, %v1064
          %v1081 = vmul.f32 %v1017, %v1065
          %v1082 = vmul.f32 %v1018, %v1066
          %v1083 = vmul.f32 %v1019, %v1067
          %v1084 = vmul.f32 %v1020, %v1068
          %v1085 = vmul.f32 %v1021, %v1069
          %v1086 = vmul.f32 %v1022, %v1070
          %v1087 = vmul.f32 %v1023, %v1071
          %v1088 = vmul.f32 %v1024, %v1072
          %v1089 = vmul.f32 %v1025, %v1073
          %v1090 = vmul.f32 %v1026, %v1074
          %v1091 = vmul.f32 %v1027, %v1075
          %v1092 = vsel %vm884, %v1044, -1e+30
          %v1093 = vsel %vm885, %v1045, -1e+30
          %v1094 = vsel %vm886, %v1046, -1e+30
          %v1095 = vsel %vm887, %v1047, -1e+30
          %v1096 = vsel %vm888, %v1048, -1e+30
          %v1097 = vsel %vm889, %v1049, -1e+30
          %v1098 = vsel %vm890, %v1050, -1e+30
          %v1099 = vsel %vm891, %v1051, -1e+30
          %v1100 = vsel %vm892, %v1052, -1e+30
          %v1101 = vsel %vm893, %v1053, -1e+30
          %v1102 = vsel %vm894, %v1054, -1e+30
          %v1103 = vsel %vm895, %v1055, -1e+30
          %v1104 = vsel %vm896, %v1056, -1e+30
          %v1105 = vsel %vm897, %v1057, -1e+30
          %v1106 = vsel %vm898, %v1058, -1e+30
          %v1107 = vsel %vm899, %v1059, -1e+30
          %1108 = vmax.xlane.f32.xlu0 %v1092
          %v1109 = vpop.xlane.xlu0 %1108
          %1110 = vmax.xlane.f32.xlu0 %v1093
          %v1111 = vpop.xlane.xlu0 %1110
          %1112 = vmax.xlane.f32.xlu0 %v1094
          %v1113 = vpop.xlane.xlu0 %1112
          %1114 = vmax.xlane.f32.xlu0 %v1095
          %v1115 = vpop.xlane.xlu0 %1114
          %1116 = vmax.xlane.f32.xlu0 %v1096
          %v1117 = vpop.xlane.xlu0 %1116
          %1118 = vmax.xlane.f32.xlu0 %v1097
          %v1119 = vpop.xlane.xlu0 %1118
          %1120 = vmax.xlane.f32.xlu0 %v1098
          %v1121 = vpop.xlane.xlu0 %1120
          %1122 = vmax.xlane.f32.xlu0 %v1099
          %v1123 = vpop.xlane.xlu0 %1122
          %1124 = vmax.xlane.f32.xlu0 %v1100
          %v1125 = vpop.xlane.xlu0 %1124
          %1126 = vmax.xlane.f32.xlu0 %v1101
          %v1127 = vpop.xlane.xlu0 %1126
          %1128 = vmax.xlane.f32.xlu0 %v1102
          %v1129 = vpop.xlane.xlu0 %1128
          %1130 = vmax.xlane.f32.xlu0 %v1103
          %v1131 = vpop.xlane.xlu0 %1130
          %1132 = vmax.xlane.f32.xlu0 %v1104
          %v1133 = vpop.xlane.xlu0 %1132
          %1134 = vmax.xlane.f32.xlu0 %v1105
          %v1135 = vpop.xlane.xlu0 %1134
          %1136 = vmax.xlane.f32.xlu0 %v1106
          %v1137 = vpop.xlane.xlu0 %1136
          %1138 = vmax.xlane.f32.xlu0 %v1107
          %v1139 = vpop.xlane.xlu0 %1138
          %v1140 = vld [vmem:[#allocation2] sm:$0xff]
          %v1141 = vld [vmem:[#allocation2 + $0x8] sm:$0xff]
          %v1142 = vld [vmem:[#allocation2 + $0x10] sm:$0xff]
          %v1143 = vld [vmem:[#allocation2 + $0x18] sm:$0xff]
          %v1144 = vld [vmem:[#allocation2 + $0x20] sm:$0xff]
          %v1145 = vld [vmem:[#allocation2 + $0x28] sm:$0xff]
          %v1146 = vld [vmem:[#allocation2 + $0x30] sm:$0xff]
          %v1147 = vld [vmem:[#allocation2 + $0x38] sm:$0xff]
          %v1148 = vld [vmem:[#allocation2 + $0x40] sm:$0xff]
          %v1149 = vld [vmem:[#allocation2 + $0x48] sm:$0xff]
          %v1150 = vld [vmem:[#allocation2 + $0x50] sm:$0xff]
          %v1151 = vld [vmem:[#allocation2 + $0x58] sm:$0xff]
          %v1152 = vld [vmem:[#allocation2 + $0x60] sm:$0xff]
          %v1153 = vld [vmem:[#allocation2 + $0x68] sm:$0xff]
          %v1154 = vld [vmem:[#allocation2 + $0x70] sm:$0xff]
          %v1155 = vld [vmem:[#allocation2 + $0x78] sm:$0xff]
          %v1156 = vmax.f32 %v1140, %v1109
          %v1157 = vmax.f32 %v1141, %v1111
          %v1158 = vmax.f32 %v1142, %v1113
          %v1159 = vmax.f32 %v1143, %v1115
          %v1160 = vmax.f32 %v1144, %v1117
          %v1161 = vmax.f32 %v1145, %v1119
          %v1162 = vmax.f32 %v1146, %v1121
          %v1163 = vmax.f32 %v1147, %v1123
          %v1164 = vmax.f32 %v1148, %v1125
          %v1165 = vmax.f32 %v1149, %v1127
          %v1166 = vmax.f32 %v1150, %v1129
          %v1167 = vmax.f32 %v1151, %v1131
          %v1168 = vmax.f32 %v1152, %v1133
          %v1169 = vmax.f32 %v1153, %v1135
          %v1170 = vmax.f32 %v1154, %v1137
          %v1171 = vmax.f32 %v1155, %v1139
          %1173 = vset.pattern.permute.xlu0 0
          %1174 = vperm.xlu0 %1173, %v1156
          %v1175 = vpop.permute.xlu0 %1174
          %1178 = vset.pattern.permute.xlu0 0
          %1179 = vperm.xlu0 %1178, %v1157
          %v1180 = vpop.permute.xlu0 %1179
          %1183 = vset.pattern.permute.xlu0 0
          %1184 = vperm.xlu0 %1183, %v1158
          %v1185 = vpop.permute.xlu0 %1184
          %1188 = vset.pattern.permute.xlu0 0
          %1189 = vperm.xlu0 %1188, %v1159
          %v1190 = vpop.permute.xlu0 %1189
          %1193 = vset.pattern.permute.xlu0 0
          %1194 = vperm.xlu0 %1193, %v1160
          %v1195 = vpop.permute.xlu0 %1194
          %1198 = vset.pattern.permute.xlu0 0
          %1199 = vperm.xlu0 %1198, %v1161
          %v1200 = vpop.permute.xlu0 %1199
          %1203 = vset.pattern.permute.xlu0 0
          %1204 = vperm.xlu0 %1203, %v1162
          %v1205 = vpop.permute.xlu0 %1204
          %1208 = vset.pattern.permute.xlu0 0
          %1209 = vperm.xlu0 %1208, %v1163
          %v1210 = vpop.permute.xlu0 %1209
          %1213 = vset.pattern.permute.xlu0 0
          %1214 = vperm.xlu0 %1213, %v1164
          %v1215 = vpop.permute.xlu0 %1214
          %1218 = vset.pattern.permute.xlu0 0
          %1219 = vperm.xlu0 %1218, %v1165
          %v1220 = vpop.permute.xlu0 %1219
          %1223 = vset.pattern.permute.xlu0 0
          %1224 = vperm.xlu0 %1223, %v1166
          %v1225 = vpop.permute.xlu0 %1224
          %1228 = vset.pattern.permute.xlu0 0
          %1229 = vperm.xlu0 %1228, %v1167
          %v1230 = vpop.permute.xlu0 %1229
          %1233 = vset.pattern.permute.xlu0 0
          %1234 = vperm.xlu0 %1233, %v1168
          %v1235 = vpop.permute.xlu0 %1234
          %1238 = vset.pattern.permute.xlu0 0
          %1239 = vperm.xlu0 %1238, %v1169
          %v1240 = vpop.permute.xlu0 %1239
          %1243 = vset.pattern.permute.xlu0 0
          %1244 = vperm.xlu0 %1243, %v1170
          %v1245 = vpop.permute.xlu0 %1244
          %1248 = vset.pattern.permute.xlu0 0
          %1249 = vperm.xlu0 %1248, %v1171
          %v1250 = vpop.permute.xlu0 %1249
          %v1252 = vsub.f32 %v1044, %v1175
          %v1253 = vsub.f32 %v1045, %v1180
          %v1254 = vsub.f32 %v1046, %v1185
          %v1255 = vsub.f32 %v1047, %v1190
          %v1256 = vsub.f32 %v1048, %v1195
          %v1257 = vsub.f32 %v1049, %v1200
          %v1258 = vsub.f32 %v1050, %v1205
          %v1259 = vsub.f32 %v1051, %v1210
          %v1260 = vsub.f32 %v1052, %v1215
          %v1261 = vsub.f32 %v1053, %v1220
          %v1262 = vsub.f32 %v1054, %v1225
          %v1263 = vsub.f32 %v1055, %v1230
          %v1264 = vsub.f32 %v1056, %v1235
          %v1265 = vsub.f32 %v1057, %v1240
          %v1266 = vsub.f32 %v1058, %v1245
          %v1267 = vsub.f32 %v1059, %v1250
          %v1268 = vmul.f32 %v1252, 1.442695
          %v1269 = vpow.pop %v1268
          %v1270 = vmul.f32 %v1253, 1.442695
          %v1271 = vpow.pop %v1270
          %v1272 = vmul.f32 %v1254, 1.442695
          %v1273 = vpow.pop %v1272
          %v1274 = vmul.f32 %v1255, 1.442695
          %v1275 = vpow.pop %v1274
          %v1276 = vmul.f32 %v1256, 1.442695
          %v1277 = vpow.pop %v1276
          %v1278 = vmul.f32 %v1257, 1.442695
          %v1279 = vpow.pop %v1278
          %v1280 = vmul.f32 %v1258, 1.442695
          %v1281 = vpow.pop %v1280
          %v1282 = vmul.f32 %v1259, 1.442695
          %v1283 = vpow.pop %v1282
          %v1284 = vmul.f32 %v1260, 1.442695
          %v1285 = vpow.pop %v1284
          %v1286 = vmul.f32 %v1261, 1.442695
          %v1287 = vpow.pop %v1286
          %v1288 = vmul.f32 %v1262, 1.442695
          %v1289 = vpow.pop %v1288
          %v1290 = vmul.f32 %v1263, 1.442695
          %v1291 = vpow.pop %v1290
          %v1292 = vmul.f32 %v1264, 1.442695
          %v1293 = vpow.pop %v1292
          %v1294 = vmul.f32 %v1265, 1.442695
          %v1295 = vpow.pop %v1294
          %v1296 = vmul.f32 %v1266, 1.442695
          %v1297 = vpow.pop %v1296
          %v1298 = vmul.f32 %v1267, 1.442695
          %v1299 = vpow.pop %v1298
          %v1300 = vsel %vm884, %v1269, 0.0
          %v1301 = vsel %vm885, %v1271, 0.0
          %v1302 = vsel %vm886, %v1273, 0.0
          %v1303 = vsel %vm887, %v1275, 0.0
          %v1304 = vsel %vm888, %v1277, 0.0
          %v1305 = vsel %vm889, %v1279, 0.0
          %v1306 = vsel %vm890, %v1281, 0.0
          %v1307 = vsel %vm891, %v1283, 0.0
          %v1308 = vsel %vm892, %v1285, 0.0
          %v1309 = vsel %vm893, %v1287, 0.0
          %v1310 = vsel %vm894, %v1289, 0.0
          %v1311 = vsel %vm895, %v1291, 0.0
          %v1312 = vsel %vm896, %v1293, 0.0
          %v1313 = vsel %vm897, %v1295, 0.0
          %v1314 = vsel %vm898, %v1297, 0.0
          %v1315 = vsel %vm899, %v1299, 0.0
          %v1316 = vld [vmem:[#allocation3] sm:$0xff]
          %v1317 = vld [vmem:[#allocation3 + $0x8] sm:$0xff]
          %v1318 = vld [vmem:[#allocation3 + $0x10] sm:$0xff]
          %v1319 = vld [vmem:[#allocation3 + $0x18] sm:$0xff]
          %v1320 = vld [vmem:[#allocation3 + $0x20] sm:$0xff]
          %v1321 = vld [vmem:[#allocation3 + $0x28] sm:$0xff]
          %v1322 = vld [vmem:[#allocation3 + $0x30] sm:$0xff]
          %v1323 = vld [vmem:[#allocation3 + $0x38] sm:$0xff]
          %v1324 = vld [vmem:[#allocation3 + $0x40] sm:$0xff]
          %v1325 = vld [vmem:[#allocation3 + $0x48] sm:$0xff]
          %v1326 = vld [vmem:[#allocation3 + $0x50] sm:$0xff]
          %v1327 = vld [vmem:[#allocation3 + $0x58] sm:$0xff]
          %v1328 = vld [vmem:[#allocation3 + $0x60] sm:$0xff]
          %v1329 = vld [vmem:[#allocation3 + $0x68] sm:$0xff]
          %v1330 = vld [vmem:[#allocation3 + $0x70] sm:$0xff]
          %v1331 = vld [vmem:[#allocation3 + $0x78] sm:$0xff]
          %v1332 = vsub.f32 %v1140, %v1156
          %v1333 = vsub.f32 %v1141, %v1157
          %v1334 = vsub.f32 %v1142, %v1158
          %v1335 = vsub.f32 %v1143, %v1159
          %v1336 = vsub.f32 %v1144, %v1160
          %v1337 = vsub.f32 %v1145, %v1161
          %v1338 = vsub.f32 %v1146, %v1162
          %v1339 = vsub.f32 %v1147, %v1163
          %v1340 = vsub.f32 %v1148, %v1164
          %v1341 = vsub.f32 %v1149, %v1165
          %v1342 = vsub.f32 %v1150, %v1166
          %v1343 = vsub.f32 %v1151, %v1167
          %v1344 = vsub.f32 %v1152, %v1168
          %v1345 = vsub.f32 %v1153, %v1169
          %v1346 = vsub.f32 %v1154, %v1170
          %v1347 = vsub.f32 %v1155, %v1171
          %v1348 = vmul.f32 %v1332, 1.442695
          %v1349 = vpow.pop %v1348
          %v1350 = vmul.f32 %v1333, 1.442695
          %v1351 = vpow.pop %v1350
          %v1352 = vmul.f32 %v1334, 1.442695
          %v1353 = vpow.pop %v1352
          %v1354 = vmul.f32 %v1335, 1.442695
          %v1355 = vpow.pop %v1354
          %v1356 = vmul.f32 %v1336, 1.442695
          %v1357 = vpow.pop %v1356
          %v1358 = vmul.f32 %v1337, 1.442695
          %v1359 = vpow.pop %v1358
          %v1360 = vmul.f32 %v1338, 1.442695
          %v1361 = vpow.pop %v1360
          %v1362 = vmul.f32 %v1339, 1.442695
          %v1363 = vpow.pop %v1362
          %v1364 = vmul.f32 %v1340, 1.442695
          %v1365 = vpow.pop %v1364
          %v1366 = vmul.f32 %v1341, 1.442695
          %v1367 = vpow.pop %v1366
          %v1368 = vmul.f32 %v1342, 1.442695
          %v1369 = vpow.pop %v1368
          %v1370 = vmul.f32 %v1343, 1.442695
          %v1371 = vpow.pop %v1370
          %v1372 = vmul.f32 %v1344, 1.442695
          %v1373 = vpow.pop %v1372
          %v1374 = vmul.f32 %v1345, 1.442695
          %v1375 = vpow.pop %v1374
          %v1376 = vmul.f32 %v1346, 1.442695
          %v1377 = vpow.pop %v1376
          %v1378 = vmul.f32 %v1347, 1.442695
          %v1379 = vpow.pop %v1378
          %v1380 = vmul.f32 %v1316, %v1349
          %v1381 = vmul.f32 %v1317, %v1351
          %v1382 = vmul.f32 %v1318, %v1353
          %v1383 = vmul.f32 %v1319, %v1355
          %v1384 = vmul.f32 %v1320, %v1357
          %v1385 = vmul.f32 %v1321, %v1359
          %v1386 = vmul.f32 %v1322, %v1361
          %v1387 = vmul.f32 %v1323, %v1363
          %v1388 = vmul.f32 %v1324, %v1365
          %v1389 = vmul.f32 %v1325, %v1367
          %v1390 = vmul.f32 %v1326, %v1369
          %v1391 = vmul.f32 %v1327, %v1371
          %v1392 = vmul.f32 %v1328, %v1373
          %v1393 = vmul.f32 %v1329, %v1375
          %v1394 = vmul.f32 %v1330, %v1377
          %v1395 = vmul.f32 %v1331, %v1379
          %1396 = vadd.xlane.f32.xlu0 %v1300
          %v1397 = vpop.xlane.xlu0 %1396
          %1398 = vadd.xlane.f32.xlu0 %v1301
          %v1399 = vpop.xlane.xlu0 %1398
          %1400 = vadd.xlane.f32.xlu0 %v1302
          %v1401 = vpop.xlane.xlu0 %1400
          %1402 = vadd.xlane.f32.xlu0 %v1303
          %v1403 = vpop.xlane.xlu0 %1402
          %1404 = vadd.xlane.f32.xlu0 %v1304
          %v1405 = vpop.xlane.xlu0 %1404
          %1406 = vadd.xlane.f32.xlu0 %v1305
          %v1407 = vpop.xlane.xlu0 %1406
          %1408 = vadd.xlane.f32.xlu0 %v1306
          %v1409 = vpop.xlane.xlu0 %1408
          %1410 = vadd.xlane.f32.xlu0 %v1307
          %v1411 = vpop.xlane.xlu0 %1410
          %1412 = vadd.xlane.f32.xlu0 %v1308
          %v1413 = vpop.xlane.xlu0 %1412
          %1414 = vadd.xlane.f32.xlu0 %v1309
          %v1415 = vpop.xlane.xlu0 %1414
          %1416 = vadd.xlane.f32.xlu0 %v1310
          %v1417 = vpop.xlane.xlu0 %1416
          %1418 = vadd.xlane.f32.xlu0 %v1311
          %v1419 = vpop.xlane.xlu0 %1418
          %1420 = vadd.xlane.f32.xlu0 %v1312
          %v1421 = vpop.xlane.xlu0 %1420
          %1422 = vadd.xlane.f32.xlu0 %v1313
          %v1423 = vpop.xlane.xlu0 %1422
          %1424 = vadd.xlane.f32.xlu0 %v1314
          %v1425 = vpop.xlane.xlu0 %1424
          %1426 = vadd.xlane.f32.xlu0 %v1315
          %v1427 = vpop.xlane.xlu0 %1426
          %v1428 = vadd.f32 %v1380, %v1397
          %v1429 = vadd.f32 %v1381, %v1399
          %v1430 = vadd.f32 %v1382, %v1401
          %v1431 = vadd.f32 %v1383, %v1403
          %v1432 = vadd.f32 %v1384, %v1405
          %v1433 = vadd.f32 %v1385, %v1407
          %v1434 = vadd.f32 %v1386, %v1409
          %v1435 = vadd.f32 %v1387, %v1411
          %v1436 = vadd.f32 %v1388, %v1413
          %v1437 = vadd.f32 %v1389, %v1415
          %v1438 = vadd.f32 %v1390, %v1417
          %v1439 = vadd.f32 %v1391, %v1419
          %v1440 = vadd.f32 %v1392, %v1421
          %v1441 = vadd.f32 %v1393, %v1423
          %v1442 = vadd.f32 %v1394, %v1425
          %v1443 = vadd.f32 %v1395, %v1427
          %vm1444 = vcmask 7168
          %1445 = vst.msk [vmem:[#allocation3] sm:$0xff] %vm1444, %v1428
          %1446 = vst.msk [vmem:[#allocation3 + $0x8] sm:$0xff] %vm1444, %v1429
          %1447 = vst.msk [vmem:[#allocation3 + $0x10] sm:$0xff] %vm1444, %v1430
          %1448 = vst.msk [vmem:[#allocation3 + $0x18] sm:$0xff] %vm1444, %v1431
          %1449 = vst.msk [vmem:[#allocation3 + $0x20] sm:$0xff] %vm1444, %v1432
          %1450 = vst.msk [vmem:[#allocation3 + $0x28] sm:$0xff] %vm1444, %v1433
          %1451 = vst.msk [vmem:[#allocation3 + $0x30] sm:$0xff] %vm1444, %v1434
          %1452 = vst.msk [vmem:[#allocation3 + $0x38] sm:$0xff] %vm1444, %v1435
          %1453 = vst.msk [vmem:[#allocation3 + $0x40] sm:$0xff] %vm1444, %v1436
          %1454 = vst.msk [vmem:[#allocation3 + $0x48] sm:$0xff] %vm1444, %v1437
          %1455 = vst.msk [vmem:[#allocation3 + $0x50] sm:$0xff] %vm1444, %v1438
          %1456 = vst.msk [vmem:[#allocation3 + $0x58] sm:$0xff] %vm1444, %v1439
          %1457 = vst.msk [vmem:[#allocation3 + $0x60] sm:$0xff] %vm1444, %v1440
          %1458 = vst.msk [vmem:[#allocation3 + $0x68] sm:$0xff] %vm1444, %v1441
          %1459 = vst.msk [vmem:[#allocation3 + $0x70] sm:$0xff] %vm1444, %v1442
          %1460 = vst.msk [vmem:[#allocation3 + $0x78] sm:$0xff] %vm1444, %v1443
          %1461 = vst.msk [vmem:[#allocation2] sm:$0xff] %vm1444, %v1156
          %1462 = vst.msk [vmem:[#allocation2 + $0x8] sm:$0xff] %vm1444, %v1157
          %1463 = vst.msk [vmem:[#allocation2 + $0x10] sm:$0xff] %vm1444, %v1158
          %1464 = vst.msk [vmem:[#allocation2 + $0x18] sm:$0xff] %vm1444, %v1159
          %1465 = vst.msk [vmem:[#allocation2 + $0x20] sm:$0xff] %vm1444, %v1160
          %1466 = vst.msk [vmem:[#allocation2 + $0x28] sm:$0xff] %vm1444, %v1161
          %1467 = vst.msk [vmem:[#allocation2 + $0x30] sm:$0xff] %vm1444, %v1162
          %1468 = vst.msk [vmem:[#allocation2 + $0x38] sm:$0xff] %vm1444, %v1163
          %1469 = vst.msk [vmem:[#allocation2 + $0x40] sm:$0xff] %vm1444, %v1164
          %1470 = vst.msk [vmem:[#allocation2 + $0x48] sm:$0xff] %vm1444, %v1165
          %1471 = vst.msk [vmem:[#allocation2 + $0x50] sm:$0xff] %vm1444, %v1166
          %1472 = vst.msk [vmem:[#allocation2 + $0x58] sm:$0xff] %vm1444, %v1167
          %1473 = vst.msk [vmem:[#allocation2 + $0x60] sm:$0xff] %vm1444, %v1168
          %1474 = vst.msk [vmem:[#allocation2 + $0x68] sm:$0xff] %vm1444, %v1169
          %1475 = vst.msk [vmem:[#allocation2 + $0x70] sm:$0xff] %vm1444, %v1170
          %1476 = vst.msk [vmem:[#allocation2 + $0x78] sm:$0xff] %vm1444, %v1171
          %v1477 = vsel %vm916, %v1076, -1e+30
          %v1478 = vsel %vm917, %v1077, -1e+30
          %v1479 = vsel %vm918, %v1078, -1e+30
          %v1480 = vsel %vm919, %v1079, -1e+30
          %v1481 = vsel %vm920, %v1080, -1e+30
          %v1482 = vsel %vm921, %v1081, -1e+30
          %v1483 = vsel %vm922, %v1082, -1e+30
          %v1484 = vsel %vm923, %v1083, -1e+30
          %v1485 = vsel %vm924, %v1084, -1e+30
          %v1486 = vsel %vm925, %v1085, -1e+30
          %v1487 = vsel %vm926, %v1086, -1e+30
          %v1488 = vsel %vm927, %v1087, -1e+30
          %v1489 = vsel %vm928, %v1088, -1e+30
          %v1490 = vsel %vm929, %v1089, -1e+30
          %v1491 = vsel %vm930, %v1090, -1e+30
          %v1492 = vsel %vm931, %v1091, -1e+30
          %1493 = vmax.xlane.f32.xlu0 %v1477
          %v1494 = vpop.xlane.xlu0 %1493
          %1495 = vmax.xlane.f32.xlu0 %v1478
          %v1496 = vpop.xlane.xlu0 %1495
          %1497 = vmax.xlane.f32.xlu0 %v1479
          %v1498 = vpop.xlane.xlu0 %1497
          %1499 = vmax.xlane.f32.xlu0 %v1480
          %v1500 = vpop.xlane.xlu0 %1499
          %1501 = vmax.xlane.f32.xlu0 %v1481
          %v1502 = vpop.xlane.xlu0 %1501
          %1503 = vmax.xlane.f32.xlu0 %v1482
          %v1504 = vpop.xlane.xlu0 %1503
          %1505 = vmax.xlane.f32.xlu0 %v1483
          %v1506 = vpop.xlane.xlu0 %1505
          %1507 = vmax.xlane.f32.xlu0 %v1484
          %v1508 = vpop.xlane.xlu0 %1507
          %1509 = vmax.xlane.f32.xlu0 %v1485
          %v1510 = vpop.xlane.xlu0 %1509
          %1511 = vmax.xlane.f32.xlu0 %v1486
          %v1512 = vpop.xlane.xlu0 %1511
          %1513 = vmax.xlane.f32.xlu0 %v1487
          %v1514 = vpop.xlane.xlu0 %1513
          %1515 = vmax.xlane.f32.xlu0 %v1488
          %v1516 = vpop.xlane.xlu0 %1515
          %1517 = vmax.xlane.f32.xlu0 %v1489
          %v1518 = vpop.xlane.xlu0 %1517
          %1519 = vmax.xlane.f32.xlu0 %v1490
          %v1520 = vpop.xlane.xlu0 %1519
          %1521 = vmax.xlane.f32.xlu0 %v1491
          %v1522 = vpop.xlane.xlu0 %1521
          %1523 = vmax.xlane.f32.xlu0 %v1492
          %v1524 = vpop.xlane.xlu0 %1523
          %v1525 = vld [vmem:[#allocation4] sm:$0xff]
          %v1526 = vld [vmem:[#allocation4 + $0x8] sm:$0xff]
          %v1527 = vld [vmem:[#allocation4 + $0x10] sm:$0xff]
          %v1528 = vld [vmem:[#allocation4 + $0x18] sm:$0xff]
          %v1529 = vld [vmem:[#allocation4 + $0x20] sm:$0xff]
          %v1530 = vld [vmem:[#allocation4 + $0x28] sm:$0xff]
          %v1531 = vld [vmem:[#allocation4 + $0x30] sm:$0xff]
          %v1532 = vld [vmem:[#allocation4 + $0x38] sm:$0xff]
          %v1533 = vld [vmem:[#allocation4 + $0x40] sm:$0xff]
          %v1534 = vld [vmem:[#allocation4 + $0x48] sm:$0xff]
          %v1535 = vld [vmem:[#allocation4 + $0x50] sm:$0xff]
          %v1536 = vld [vmem:[#allocation4 + $0x58] sm:$0xff]
          %v1537 = vld [vmem:[#allocation4 + $0x60] sm:$0xff]
          %v1538 = vld [vmem:[#allocation4 + $0x68] sm:$0xff]
          %v1539 = vld [vmem:[#allocation4 + $0x70] sm:$0xff]
          %v1540 = vld [vmem:[#allocation4 + $0x78] sm:$0xff]
          %v1541 = vmax.f32 %v1525, %v1494
          %v1542 = vmax.f32 %v1526, %v1496
          %v1543 = vmax.f32 %v1527, %v1498
          %v1544 = vmax.f32 %v1528, %v1500
          %v1545 = vmax.f32 %v1529, %v1502
          %v1546 = vmax.f32 %v1530, %v1504
          %v1547 = vmax.f32 %v1531, %v1506
          %v1548 = vmax.f32 %v1532, %v1508
          %v1549 = vmax.f32 %v1533, %v1510
          %v1550 = vmax.f32 %v1534, %v1512
          %v1551 = vmax.f32 %v1535, %v1514
          %v1552 = vmax.f32 %v1536, %v1516
          %v1553 = vmax.f32 %v1537, %v1518
          %v1554 = vmax.f32 %v1538, %v1520
          %v1555 = vmax.f32 %v1539, %v1522
          %v1556 = vmax.f32 %v1540, %v1524
          %1558 = vset.pattern.permute.xlu0 0
          %1559 = vperm.xlu0 %1558, %v1541
          %v1560 = vpop.permute.xlu0 %1559
          %1563 = vset.pattern.permute.xlu0 0
          %1564 = vperm.xlu0 %1563, %v1542
          %v1565 = vpop.permute.xlu0 %1564
          %1568 = vset.pattern.permute.xlu0 0
          %1569 = vperm.xlu0 %1568, %v1543
          %v1570 = vpop.permute.xlu0 %1569
          %1573 = vset.pattern.permute.xlu0 0
          %1574 = vperm.xlu0 %1573, %v1544
          %v1575 = vpop.permute.xlu0 %1574
          %1578 = vset.pattern.permute.xlu0 0
          %1579 = vperm.xlu0 %1578, %v1545
          %v1580 = vpop.permute.xlu0 %1579
          %1583 = vset.pattern.permute.xlu0 0
          %1584 = vperm.xlu0 %1583, %v1546
          %v1585 = vpop.permute.xlu0 %1584
          %1588 = vset.pattern.permute.xlu0 0
          %1589 = vperm.xlu0 %1588, %v1547
          %v1590 = vpop.permute.xlu0 %1589
          %1593 = vset.pattern.permute.xlu0 0
          %1594 = vperm.xlu0 %1593, %v1548
          %v1595 = vpop.permute.xlu0 %1594
          %1598 = vset.pattern.permute.xlu0 0
          %1599 = vperm.xlu0 %1598, %v1549
          %v1600 = vpop.permute.xlu0 %1599
          %1603 = vset.pattern.permute.xlu0 0
          %1604 = vperm.xlu0 %1603, %v1550
          %v1605 = vpop.permute.xlu0 %1604
          %1608 = vset.pattern.permute.xlu0 0
          %1609 = vperm.xlu0 %1608, %v1551
          %v1610 = vpop.permute.xlu0 %1609
          %1613 = vset.pattern.permute.xlu0 0
          %1614 = vperm.xlu0 %1613, %v1552
          %v1615 = vpop.permute.xlu0 %1614
          %1618 = vset.pattern.permute.xlu0 0
          %1619 = vperm.xlu0 %1618, %v1553
          %v1620 = vpop.permute.xlu0 %1619
          %1623 = vset.pattern.permute.xlu0 0
          %1624 = vperm.xlu0 %1623, %v1554
          %v1625 = vpop.permute.xlu0 %1624
          %1628 = vset.pattern.permute.xlu0 0
          %1629 = vperm.xlu0 %1628, %v1555
          %v1630 = vpop.permute.xlu0 %1629
          %1633 = vset.pattern.permute.xlu0 0
          %1634 = vperm.xlu0 %1633, %v1556
          %v1635 = vpop.permute.xlu0 %1634
          %v1637 = vsub.f32 %v1076, %v1560
          %v1638 = vsub.f32 %v1077, %v1565
          %v1639 = vsub.f32 %v1078, %v1570
          %v1640 = vsub.f32 %v1079, %v1575
          %v1641 = vsub.f32 %v1080, %v1580
          %v1642 = vsub.f32 %v1081, %v1585
          %v1643 = vsub.f32 %v1082, %v1590
          %v1644 = vsub.f32 %v1083, %v1595
          %v1645 = vsub.f32 %v1084, %v1600
          %v1646 = vsub.f32 %v1085, %v1605
          %v1647 = vsub.f32 %v1086, %v1610
          %v1648 = vsub.f32 %v1087, %v1615
          %v1649 = vsub.f32 %v1088, %v1620
          %v1650 = vsub.f32 %v1089, %v1625
          %v1651 = vsub.f32 %v1090, %v1630
          %v1652 = vsub.f32 %v1091, %v1635
          %v1653 = vmul.f32 %v1637, 1.442695
          %v1654 = vpow.pop %v1653
          %v1655 = vmul.f32 %v1638, 1.442695
          %v1656 = vpow.pop %v1655
          %v1657 = vmul.f32 %v1639, 1.442695
          %v1658 = vpow.pop %v1657
          %v1659 = vmul.f32 %v1640, 1.442695
          %v1660 = vpow.pop %v1659
          %v1661 = vmul.f32 %v1641, 1.442695
          %v1662 = vpow.pop %v1661
          %v1663 = vmul.f32 %v1642, 1.442695
          %v1664 = vpow.pop %v1663
          %v1665 = vmul.f32 %v1643, 1.442695
          %v1666 = vpow.pop %v1665
          %v1667 = vmul.f32 %v1644, 1.442695
          %v1668 = vpow.pop %v1667
          %v1669 = vmul.f32 %v1645, 1.442695
          %v1670 = vpow.pop %v1669
          %v1671 = vmul.f32 %v1646, 1.442695
          %v1672 = vpow.pop %v1671
          %v1673 = vmul.f32 %v1647, 1.442695
          %v1674 = vpow.pop %v1673
          %v1675 = vmul.f32 %v1648, 1.442695
          %v1676 = vpow.pop %v1675
          %v1677 = vmul.f32 %v1649, 1.442695
          %v1678 = vpow.pop %v1677
          %v1679 = vmul.f32 %v1650, 1.442695
          %v1680 = vpow.pop %v1679
          %v1681 = vmul.f32 %v1651, 1.442695
          %v1682 = vpow.pop %v1681
          %v1683 = vmul.f32 %v1652, 1.442695
          %v1684 = vpow.pop %v1683
          %v1685 = vsel %vm916, %v1654, 0.0
          %v1686 = vsel %vm917, %v1656, 0.0
          %v1687 = vsel %vm918, %v1658, 0.0
          %v1688 = vsel %vm919, %v1660, 0.0
          %v1689 = vsel %vm920, %v1662, 0.0
          %v1690 = vsel %vm921, %v1664, 0.0
          %v1691 = vsel %vm922, %v1666, 0.0
          %v1692 = vsel %vm923, %v1668, 0.0
          %v1693 = vsel %vm924, %v1670, 0.0
          %v1694 = vsel %vm925, %v1672, 0.0
          %v1695 = vsel %vm926, %v1674, 0.0
          %v1696 = vsel %vm927, %v1676, 0.0
          %v1697 = vsel %vm928, %v1678, 0.0
          %v1698 = vsel %vm929, %v1680, 0.0
          %v1699 = vsel %vm930, %v1682, 0.0
          %v1700 = vsel %vm931, %v1684, 0.0
          %v1701 = vld [vmem:[#allocation5] sm:$0xff]
          %v1702 = vld [vmem:[#allocation5 + $0x8] sm:$0xff]
          %v1703 = vld [vmem:[#allocation5 + $0x10] sm:$0xff]
          %v1704 = vld [vmem:[#allocation5 + $0x18] sm:$0xff]
          %v1705 = vld [vmem:[#allocation5 + $0x20] sm:$0xff]
          %v1706 = vld [vmem:[#allocation5 + $0x28] sm:$0xff]
          %v1707 = vld [vmem:[#allocation5 + $0x30] sm:$0xff]
          %v1708 = vld [vmem:[#allocation5 + $0x38] sm:$0xff]
          %v1709 = vld [vmem:[#allocation5 + $0x40] sm:$0xff]
          %v1710 = vld [vmem:[#allocation5 + $0x48] sm:$0xff]
          %v1711 = vld [vmem:[#allocation5 + $0x50] sm:$0xff]
          %v1712 = vld [vmem:[#allocation5 + $0x58] sm:$0xff]
          %v1713 = vld [vmem:[#allocation5 + $0x60] sm:$0xff]
          %v1714 = vld [vmem:[#allocation5 + $0x68] sm:$0xff]
          %v1715 = vld [vmem:[#allocation5 + $0x70] sm:$0xff]
          %v1716 = vld [vmem:[#allocation5 + $0x78] sm:$0xff]
          %v1717 = vsub.f32 %v1525, %v1541
          %v1718 = vsub.f32 %v1526, %v1542
          %v1719 = vsub.f32 %v1527, %v1543
          %v1720 = vsub.f32 %v1528, %v1544
          %v1721 = vsub.f32 %v1529, %v1545
          %v1722 = vsub.f32 %v1530, %v1546
          %v1723 = vsub.f32 %v1531, %v1547
          %v1724 = vsub.f32 %v1532, %v1548
          %v1725 = vsub.f32 %v1533, %v1549
          %v1726 = vsub.f32 %v1534, %v1550
          %v1727 = vsub.f32 %v1535, %v1551
          %v1728 = vsub.f32 %v1536, %v1552
          %v1729 = vsub.f32 %v1537, %v1553
          %v1730 = vsub.f32 %v1538, %v1554
          %v1731 = vsub.f32 %v1539, %v1555
          %v1732 = vsub.f32 %v1540, %v1556
          %v1733 = vmul.f32 %v1717, 1.442695
          %v1734 = vpow.pop %v1733
          %v1735 = vmul.f32 %v1718, 1.442695
          %v1736 = vpow.pop %v1735
          %v1737 = vmul.f32 %v1719, 1.442695
          %v1738 = vpow.pop %v1737
          %v1739 = vmul.f32 %v1720, 1.442695
          %v1740 = vpow.pop %v1739
          %v1741 = vmul.f32 %v1721, 1.442695
          %v1742 = vpow.pop %v1741
          %v1743 = vmul.f32 %v1722, 1.442695
          %v1744 = vpow.pop %v1743
          %v1745 = vmul.f32 %v1723, 1.442695
          %v1746 = vpow.pop %v1745
          %v1747 = vmul.f32 %v1724, 1.442695
          %v1748 = vpow.pop %v1747
          %v1749 = vmul.f32 %v1725, 1.442695
          %v1750 = vpow.pop %v1749
          %v1751 = vmul.f32 %v1726, 1.442695
          %v1752 = vpow.pop %v1751
          %v1753 = vmul.f32 %v1727, 1.442695
          %v1754 = vpow.pop %v1753
          %v1755 = vmul.f32 %v1728, 1.442695
          %v1756 = vpow.pop %v1755
          %v1757 = vmul.f32 %v1729, 1.442695
          %v1758 = vpow.pop %v1757
          %v1759 = vmul.f32 %v1730, 1.442695
          %v1760 = vpow.pop %v1759
          %v1761 = vmul.f32 %v1731, 1.442695
          %v1762 = vpow.pop %v1761
          %v1763 = vmul.f32 %v1732, 1.442695
          %v1764 = vpow.pop %v1763
          %v1765 = vmul.f32 %v1701, %v1734
          %v1766 = vmul.f32 %v1702, %v1736
          %v1767 = vmul.f32 %v1703, %v1738
          %v1768 = vmul.f32 %v1704, %v1740
          %v1769 = vmul.f32 %v1705, %v1742
          %v1770 = vmul.f32 %v1706, %v1744
          %v1771 = vmul.f32 %v1707, %v1746
          %v1772 = vmul.f32 %v1708, %v1748
          %v1773 = vmul.f32 %v1709, %v1750
          %v1774 = vmul.f32 %v1710, %v1752
          %v1775 = vmul.f32 %v1711, %v1754
          %v1776 = vmul.f32 %v1712, %v1756
          %v1777 = vmul.f32 %v1713, %v1758
          %v1778 = vmul.f32 %v1714, %v1760
          %v1779 = vmul.f32 %v1715, %v1762
          %v1780 = vmul.f32 %v1716, %v1764
          %1781 = vadd.xlane.f32.xlu0 %v1685
          %v1782 = vpop.xlane.xlu0 %1781
          %1783 = vadd.xlane.f32.xlu0 %v1686
          %v1784 = vpop.xlane.xlu0 %1783
          %1785 = vadd.xlane.f32.xlu0 %v1687
          %v1786 = vpop.xlane.xlu0 %1785
          %1787 = vadd.xlane.f32.xlu0 %v1688
          %v1788 = vpop.xlane.xlu0 %1787
          %1789 = vadd.xlane.f32.xlu0 %v1689
          %v1790 = vpop.xlane.xlu0 %1789
          %1791 = vadd.xlane.f32.xlu0 %v1690
          %v1792 = vpop.xlane.xlu0 %1791
          %1793 = vadd.xlane.f32.xlu0 %v1691
          %v1794 = vpop.xlane.xlu0 %1793
          %1795 = vadd.xlane.f32.xlu0 %v1692
          %v1796 = vpop.xlane.xlu0 %1795
          %1797 = vadd.xlane.f32.xlu0 %v1693
          %v1798 = vpop.xlane.xlu0 %1797
          %1799 = vadd.xlane.f32.xlu0 %v1694
          %v1800 = vpop.xlane.xlu0 %1799
          %1801 = vadd.xlane.f32.xlu0 %v1695
          %v1802 = vpop.xlane.xlu0 %1801
          %1803 = vadd.xlane.f32.xlu0 %v1696
          %v1804 = vpop.xlane.xlu0 %1803
          %1805 = vadd.xlane.f32.xlu0 %v1697
          %v1806 = vpop.xlane.xlu0 %1805
          %1807 = vadd.xlane.f32.xlu0 %v1698
          %v1808 = vpop.xlane.xlu0 %1807
          %1809 = vadd.xlane.f32.xlu0 %v1699
          %v1810 = vpop.xlane.xlu0 %1809
          %1811 = vadd.xlane.f32.xlu0 %v1700
          %v1812 = vpop.xlane.xlu0 %1811
          %v1813 = vadd.f32 %v1765, %v1782
          %v1814 = vadd.f32 %v1766, %v1784
          %v1815 = vadd.f32 %v1767, %v1786
          %v1816 = vadd.f32 %v1768, %v1788
          %v1817 = vadd.f32 %v1769, %v1790
          %v1818 = vadd.f32 %v1770, %v1792
          %v1819 = vadd.f32 %v1771, %v1794
          %v1820 = vadd.f32 %v1772, %v1796
          %v1821 = vadd.f32 %v1773, %v1798
          %v1822 = vadd.f32 %v1774, %v1800
          %v1823 = vadd.f32 %v1775, %v1802
          %v1824 = vadd.f32 %v1776, %v1804
          %v1825 = vadd.f32 %v1777, %v1806
          %v1826 = vadd.f32 %v1778, %v1808
          %v1827 = vadd.f32 %v1779, %v1810
          %v1828 = vadd.f32 %v1780, %v1812
          %1829 = vst.msk [vmem:[#allocation5] sm:$0xff] %vm1444, %v1813
          %1830 = vst.msk [vmem:[#allocation5 + $0x8] sm:$0xff] %vm1444, %v1814
          %1831 = vst.msk [vmem:[#allocation5 + $0x10] sm:$0xff] %vm1444, %v1815
          %1832 = vst.msk [vmem:[#allocation5 + $0x18] sm:$0xff] %vm1444, %v1816
          %1833 = vst.msk [vmem:[#allocation5 + $0x20] sm:$0xff] %vm1444, %v1817
          %1834 = vst.msk [vmem:[#allocation5 + $0x28] sm:$0xff] %vm1444, %v1818
          %1835 = vst.msk [vmem:[#allocation5 + $0x30] sm:$0xff] %vm1444, %v1819
          %1836 = vst.msk [vmem:[#allocation5 + $0x38] sm:$0xff] %vm1444, %v1820
          %1837 = vst.msk [vmem:[#allocation5 + $0x40] sm:$0xff] %vm1444, %v1821
          %1838 = vst.msk [vmem:[#allocation5 + $0x48] sm:$0xff] %vm1444, %v1822
          %1839 = vst.msk [vmem:[#allocation5 + $0x50] sm:$0xff] %vm1444, %v1823
          %1840 = vst.msk [vmem:[#allocation5 + $0x58] sm:$0xff] %vm1444, %v1824
          %1841 = vst.msk [vmem:[#allocation5 + $0x60] sm:$0xff] %vm1444, %v1825
          %1842 = vst.msk [vmem:[#allocation5 + $0x68] sm:$0xff] %vm1444, %v1826
          %1843 = vst.msk [vmem:[#allocation5 + $0x70] sm:$0xff] %vm1444, %v1827
          %1844 = vst.msk [vmem:[#allocation5 + $0x78] sm:$0xff] %vm1444, %v1828
          %1845 = vst.msk [vmem:[#allocation4] sm:$0xff] %vm1444, %v1541
          %1846 = vst.msk [vmem:[#allocation4 + $0x8] sm:$0xff] %vm1444, %v1542
          %1847 = vst.msk [vmem:[#allocation4 + $0x10] sm:$0xff] %vm1444, %v1543
          %1848 = vst.msk [vmem:[#allocation4 + $0x18] sm:$0xff] %vm1444, %v1544
          %1849 = vst.msk [vmem:[#allocation4 + $0x20] sm:$0xff] %vm1444, %v1545
          %1850 = vst.msk [vmem:[#allocation4 + $0x28] sm:$0xff] %vm1444, %v1546
          %1851 = vst.msk [vmem:[#allocation4 + $0x30] sm:$0xff] %vm1444, %v1547
          %1852 = vst.msk [vmem:[#allocation4 + $0x38] sm:$0xff] %vm1444, %v1548
          %1853 = vst.msk [vmem:[#allocation4 + $0x40] sm:$0xff] %vm1444, %v1549
          %1854 = vst.msk [vmem:[#allocation4 + $0x48] sm:$0xff] %vm1444, %v1550
          %1855 = vst.msk [vmem:[#allocation4 + $0x50] sm:$0xff] %vm1444, %v1551
          %1856 = vst.msk [vmem:[#allocation4 + $0x58] sm:$0xff] %vm1444, %v1552
          %1857 = vst.msk [vmem:[#allocation4 + $0x60] sm:$0xff] %vm1444, %v1553
          %1858 = vst.msk [vmem:[#allocation4 + $0x68] sm:$0xff] %vm1444, %v1554
          %1859 = vst.msk [vmem:[#allocation4 + $0x70] sm:$0xff] %vm1444, %v1555
          %1860 = vst.msk [vmem:[#allocation4 + $0x78] sm:$0xff] %vm1444, %v1556
        $region82: #{tpu_custom_call.1} parent=69 // pred_fallthru
          _
        %p1861 = scmp.eq.s32.totalorder %s24, 1
        // Predicated region
        $region83: #{tpu_custom_call.1} parent=69 // pred_check
          %p1862 = pneg %p1861
        $region84: #{tpu_custom_call.1} parent=69 // pred_check_branch
          %1864 = sbr.rel (%p1862) target = $region86
        $region85: #{tpu_custom_call.1} parent=69 // pred_region
          %v1865 = vld [vmem:[#allocation2] sm:$0xff]
          %v1866 = vld [vmem:[#allocation2 + $0x8] sm:$0xff]
          %v1867 = vld [vmem:[#allocation2 + $0x10] sm:$0xff]
          %v1868 = vld [vmem:[#allocation2 + $0x18] sm:$0xff]
          %v1869 = vld [vmem:[#allocation2 + $0x20] sm:$0xff]
          %v1870 = vld [vmem:[#allocation2 + $0x28] sm:$0xff]
          %v1871 = vld [vmem:[#allocation2 + $0x30] sm:$0xff]
          %v1872 = vld [vmem:[#allocation2 + $0x38] sm:$0xff]
          %v1873 = vld [vmem:[#allocation2 + $0x40] sm:$0xff]
          %v1874 = vld [vmem:[#allocation2 + $0x48] sm:$0xff]
          %v1875 = vld [vmem:[#allocation2 + $0x50] sm:$0xff]
          %v1876 = vld [vmem:[#allocation2 + $0x58] sm:$0xff]
          %v1877 = vld [vmem:[#allocation2 + $0x60] sm:$0xff]
          %v1878 = vld [vmem:[#allocation2 + $0x68] sm:$0xff]
          %v1879 = vld [vmem:[#allocation2 + $0x70] sm:$0xff]
          %v1880 = vld [vmem:[#allocation2 + $0x78] sm:$0xff]
          %vm1881 = vcmask 7168
          %1882 = vst.msk [vmem:[%s432] sm:$0xff] %vm1881, %v1865
          %1883 = vst.msk [vmem:[%s432 + $0x8] sm:$0xff] %vm1881, %v1866
          %1884 = vst.msk [vmem:[%s432 + $0x10] sm:$0xff] %vm1881, %v1867
          %1885 = vst.msk [vmem:[%s432 + $0x18] sm:$0xff] %vm1881, %v1868
          %1886 = vst.msk [vmem:[%s432 + $0x20] sm:$0xff] %vm1881, %v1869
          %1887 = vst.msk [vmem:[%s432 + $0x28] sm:$0xff] %vm1881, %v1870
          %1888 = vst.msk [vmem:[%s432 + $0x30] sm:$0xff] %vm1881, %v1871
          %1889 = vst.msk [vmem:[%s432 + $0x38] sm:$0xff] %vm1881, %v1872
          %1890 = vst.msk [vmem:[%s432 + $0x40] sm:$0xff] %vm1881, %v1873
          %1891 = vst.msk [vmem:[%s432 + $0x48] sm:$0xff] %vm1881, %v1874
          %1892 = vst.msk [vmem:[%s432 + $0x50] sm:$0xff] %vm1881, %v1875
          %1893 = vst.msk [vmem:[%s432 + $0x58] sm:$0xff] %vm1881, %v1876
          %1894 = vst.msk [vmem:[%s432 + $0x60] sm:$0xff] %vm1881, %v1877
          %1895 = vst.msk [vmem:[%s432 + $0x68] sm:$0xff] %vm1881, %v1878
          %1896 = vst.msk [vmem:[%s432 + $0x70] sm:$0xff] %vm1881, %v1879
          %1897 = vst.msk [vmem:[%s432 + $0x78] sm:$0xff] %vm1881, %v1880
          %v1898 = vld [vmem:[#allocation3] sm:$0xff]
          %v1899 = vld [vmem:[#allocation3 + $0x8] sm:$0xff]
          %v1900 = vld [vmem:[#allocation3 + $0x10] sm:$0xff]
          %v1901 = vld [vmem:[#allocation3 + $0x18] sm:$0xff]
          %v1902 = vld [vmem:[#allocation3 + $0x20] sm:$0xff]
          %v1903 = vld [vmem:[#allocation3 + $0x28] sm:$0xff]
          %v1904 = vld [vmem:[#allocation3 + $0x30] sm:$0xff]
          %v1905 = vld [vmem:[#allocation3 + $0x38] sm:$0xff]
          %v1906 = vld [vmem:[#allocation3 + $0x40] sm:$0xff]
          %v1907 = vld [vmem:[#allocation3 + $0x48] sm:$0xff]
          %v1908 = vld [vmem:[#allocation3 + $0x50] sm:$0xff]
          %v1909 = vld [vmem:[#allocation3 + $0x58] sm:$0xff]
          %v1910 = vld [vmem:[#allocation3 + $0x60] sm:$0xff]
          %v1911 = vld [vmem:[#allocation3 + $0x68] sm:$0xff]
          %v1912 = vld [vmem:[#allocation3 + $0x70] sm:$0xff]
          %v1913 = vld [vmem:[#allocation3 + $0x78] sm:$0xff]
          %1914 = vst.msk [vmem:[%s438] sm:$0xff] %vm1881, %v1898
          %1915 = vst.msk [vmem:[%s438 + $0x8] sm:$0xff] %vm1881, %v1899
          %1916 = vst.msk [vmem:[%s438 + $0x10] sm:$0xff] %vm1881, %v1900
          %1917 = vst.msk [vmem:[%s438 + $0x18] sm:$0xff] %vm1881, %v1901
          %1918 = vst.msk [vmem:[%s438 + $0x20] sm:$0xff] %vm1881, %v1902
          %1919 = vst.msk [vmem:[%s438 + $0x28] sm:$0xff] %vm1881, %v1903
          %1920 = vst.msk [vmem:[%s438 + $0x30] sm:$0xff] %vm1881, %v1904
          %1921 = vst.msk [vmem:[%s438 + $0x38] sm:$0xff] %vm1881, %v1905
          %1922 = vst.msk [vmem:[%s438 + $0x40] sm:$0xff] %vm1881, %v1906
          %1923 = vst.msk [vmem:[%s438 + $0x48] sm:$0xff] %vm1881, %v1907
          %1924 = vst.msk [vmem:[%s438 + $0x50] sm:$0xff] %vm1881, %v1908
          %1925 = vst.msk [vmem:[%s438 + $0x58] sm:$0xff] %vm1881, %v1909
          %1926 = vst.msk [vmem:[%s438 + $0x60] sm:$0xff] %vm1881, %v1910
          %1927 = vst.msk [vmem:[%s438 + $0x68] sm:$0xff] %vm1881, %v1911
          %1928 = vst.msk [vmem:[%s438 + $0x70] sm:$0xff] %vm1881, %v1912
          %1929 = vst.msk [vmem:[%s438 + $0x78] sm:$0xff] %vm1881, %v1913
          %v1930 = vld [vmem:[#allocation4] sm:$0xff]
          %v1931 = vld [vmem:[#allocation4 + $0x8] sm:$0xff]
          %v1932 = vld [vmem:[#allocation4 + $0x10] sm:$0xff]
          %v1933 = vld [vmem:[#allocation4 + $0x18] sm:$0xff]
          %v1934 = vld [vmem:[#allocation4 + $0x20] sm:$0xff]
          %v1935 = vld [vmem:[#allocation4 + $0x28] sm:$0xff]
          %v1936 = vld [vmem:[#allocation4 + $0x30] sm:$0xff]
          %v1937 = vld [vmem:[#allocation4 + $0x38] sm:$0xff]
          %v1938 = vld [vmem:[#allocation4 + $0x40] sm:$0xff]
          %v1939 = vld [vmem:[#allocation4 + $0x48] sm:$0xff]
          %v1940 = vld [vmem:[#allocation4 + $0x50] sm:$0xff]
          %v1941 = vld [vmem:[#allocation4 + $0x58] sm:$0xff]
          %v1942 = vld [vmem:[#allocation4 + $0x60] sm:$0xff]
          %v1943 = vld [vmem:[#allocation4 + $0x68] sm:$0xff]
          %v1944 = vld [vmem:[#allocation4 + $0x70] sm:$0xff]
          %v1945 = vld [vmem:[#allocation4 + $0x78] sm:$0xff]
          %1946 = vst.msk [vmem:[%s444] sm:$0xff] %vm1881, %v1930
          %1947 = vst.msk [vmem:[%s444 + $0x8] sm:$0xff] %vm1881, %v1931
          %1948 = vst.msk [vmem:[%s444 + $0x10] sm:$0xff] %vm1881, %v1932
          %1949 = vst.msk [vmem:[%s444 + $0x18] sm:$0xff] %vm1881, %v1933
          %1950 = vst.msk [vmem:[%s444 + $0x20] sm:$0xff] %vm1881, %v1934
          %1951 = vst.msk [vmem:[%s444 + $0x28] sm:$0xff] %vm1881, %v1935
          %1952 = vst.msk [vmem:[%s444 + $0x30] sm:$0xff] %vm1881, %v1936
          %1953 = vst.msk [vmem:[%s444 + $0x38] sm:$0xff] %vm1881, %v1937
          %1954 = vst.msk [vmem:[%s444 + $0x40] sm:$0xff] %vm1881, %v1938
          %1955 = vst.msk [vmem:[%s444 + $0x48] sm:$0xff] %vm1881, %v1939
          %1956 = vst.msk [vmem:[%s444 + $0x50] sm:$0xff] %vm1881, %v1940
          %1957 = vst.msk [vmem:[%s444 + $0x58] sm:$0xff] %vm1881, %v1941
          %1958 = vst.msk [vmem:[%s444 + $0x60] sm:$0xff] %vm1881, %v1942
          %1959 = vst.msk [vmem:[%s444 + $0x68] sm:$0xff] %vm1881, %v1943
          %1960 = vst.msk [vmem:[%s444 + $0x70] sm:$0xff] %vm1881, %v1944
          %1961 = vst.msk [vmem:[%s444 + $0x78] sm:$0xff] %vm1881, %v1945
          %v1962 = vld [vmem:[#allocation5] sm:$0xff]
          %v1963 = vld [vmem:[#allocation5 + $0x8] sm:$0xff]
          %v1964 = vld [vmem:[#allocation5 + $0x10] sm:$0xff]
          %v1965 = vld [vmem:[#allocation5 + $0x18] sm:$0xff]
          %v1966 = vld [vmem:[#allocation5 + $0x20] sm:$0xff]
          %v1967 = vld [vmem:[#allocation5 + $0x28] sm:$0xff]
          %v1968 = vld [vmem:[#allocation5 + $0x30] sm:$0xff]
          %v1969 = vld [vmem:[#allocation5 + $0x38] sm:$0xff]
          %v1970 = vld [vmem:[#allocation5 + $0x40] sm:$0xff]
          %v1971 = vld [vmem:[#allocation5 + $0x48] sm:$0xff]
          %v1972 = vld [vmem:[#allocation5 + $0x50] sm:$0xff]
          %v1973 = vld [vmem:[#allocation5 + $0x58] sm:$0xff]
          %v1974 = vld [vmem:[#allocation5 + $0x60] sm:$0xff]
          %v1975 = vld [vmem:[#allocation5 + $0x68] sm:$0xff]
          %v1976 = vld [vmem:[#allocation5 + $0x70] sm:$0xff]
          %v1977 = vld [vmem:[#allocation5 + $0x78] sm:$0xff]
          %1978 = vst.msk [vmem:[%s450] sm:$0xff] %vm1881, %v1962
          %1979 = vst.msk [vmem:[%s450 + $0x8] sm:$0xff] %vm1881, %v1963
          %1980 = vst.msk [vmem:[%s450 + $0x10] sm:$0xff] %vm1881, %v1964
          %1981 = vst.msk [vmem:[%s450 + $0x18] sm:$0xff] %vm1881, %v1965
          %1982 = vst.msk [vmem:[%s450 + $0x20] sm:$0xff] %vm1881, %v1966
          %1983 = vst.msk [vmem:[%s450 + $0x28] sm:$0xff] %vm1881, %v1967
          %1984 = vst.msk [vmem:[%s450 + $0x30] sm:$0xff] %vm1881, %v1968
          %1985 = vst.msk [vmem:[%s450 + $0x38] sm:$0xff] %vm1881, %v1969
          %1986 = vst.msk [vmem:[%s450 + $0x40] sm:$0xff] %vm1881, %v1970
          %1987 = vst.msk [vmem:[%s450 + $0x48] sm:$0xff] %vm1881, %v1971
          %1988 = vst.msk [vmem:[%s450 + $0x50] sm:$0xff] %vm1881, %v1972
          %1989 = vst.msk [vmem:[%s450 + $0x58] sm:$0xff] %vm1881, %v1973
          %1990 = vst.msk [vmem:[%s450 + $0x60] sm:$0xff] %vm1881, %v1974
          %1991 = vst.msk [vmem:[%s450 + $0x68] sm:$0xff] %vm1881, %v1975
          %1992 = vst.msk [vmem:[%s450 + $0x70] sm:$0xff] %vm1881, %v1976
          %1993 = vst.msk [vmem:[%s450 + $0x78] sm:$0xff] %vm1881, %v1977
        $region86: #{tpu_custom_call.1} parent=69 // pred_fallthru
          _
        %s1994 = smul.u32 16, %s23
        %p1995 = scmp.lt.s32.totalorder %s1994, 31
        %s1996 = scalar_select %p1995, %s1994, 31
        %s1997 = smul.addr %s1996, 8
        %s1998 = scalar_lea.vmem %s4, %s1997
        %s1999 = smul.u32 16, %s23
        %p2000 = scmp.lt.s32.totalorder %s1999, 31
        %s2001 = scalar_select %p2000, %s1999, 31
        %s2002 = smul.addr %s2001, 8
        %s2003 = scalar_lea.vmem %s5, %s2002
        %s2004 = smul.u32 16, %s23
        %p2005 = scmp.lt.s32.totalorder %s2004, 31
        %s2006 = scalar_select %p2005, %s2004, 31
        %s2007 = smul.addr %s2006, 8
        %s2008 = scalar_lea.vmem %s6, %s2007
        %s2009 = smul.u32 16, %s23
        %p2010 = scmp.lt.s32.totalorder %s2009, 31
        %s2011 = scalar_select %p2010, %s2009, 31
        %s2012 = smul.addr %s2011, 8
        %s2013 = scalar_lea.vmem %s7, %s2012
        // Predicated region
        $region87: #{tpu_custom_call.1} parent=69 // pred_check
          %p2014 = pneg %p153
        $region88: #{tpu_custom_call.1} parent=69 // pred_check_branch
          %2016 = sbr.rel (%p2014) target = $region90
        $region89: #{tpu_custom_call.1} parent=69 // pred_region
          %s2017 = smul.u32 16, %s23
        $region90: #{tpu_custom_call.1} parent=69 // pred_fallthru
          _
        // Predicated region
        $region91: #{tpu_custom_call.1} parent=69 // pred_check
          %p2018 = pneg %p179
        $region92: #{tpu_custom_call.1} parent=69 // pred_check_branch
          %2020 = sbr.rel (%p2018) target = $region94
        $region93: #{tpu_custom_call.1} parent=69 // pred_region
          %s2021 = smul.u32 16, %s23
        $region94: #{tpu_custom_call.1} parent=69 // pred_fallthru
          _
        // Predicated region
        $region95: #{tpu_custom_call.1} parent=69 // pred_check
          %p2022 = pneg %p205
        $region96: #{tpu_custom_call.1} parent=69 // pred_check_branch
          %2024 = sbr.rel (%p2022) target = $region98
        $region97: #{tpu_custom_call.1} parent=69 // pred_region
          %s2025 = smul.u32 16, %s23
        $region98: #{tpu_custom_call.1} parent=69 // pred_fallthru
          _
        // Predicated region
        $region99: #{tpu_custom_call.1} parent=69 // pred_check
          %p2026 = pneg %p231
        $region100: #{tpu_custom_call.1} parent=69 // pred_check_branch
          %2028 = sbr.rel (%p2026) target = $region102
        $region101: #{tpu_custom_call.1} parent=69 // pred_region
          %s2029 = smul.u32 16, %s23
        $region102: #{tpu_custom_call.1} parent=69 // pred_fallthru
          _
      $region70: #{tpu_custom_call.1} parent=5 // pred_fallthru
        _
      %p2030 = scmp.le.s32.totalorder 2, %s14
      // Predicated region
      $region103: #{tpu_custom_call.1} parent=5 // pred_check
        %p2031 = pneg %p2030
      $region104: #{tpu_custom_call.1} parent=5 // pred_check_branch
        %2033 = sbr.rel (%p2031) target = $region106
      $region105: #{tpu_custom_call.1} parent=5 // pred_region
        %s2034 = ssub.s32 %s14, 2
        // Predicated region
        $region107: #{tpu_custom_call.1} parent=105 // pred_check
          %p2035 = pneg %p159
        $region108: #{tpu_custom_call.1} parent=105 // pred_check_branch
          %2037 = sbr.rel (%p2035) target = $region110
        $region109: #{tpu_custom_call.1} parent=105 // pred_region
          %s2038 = smul.u32 16, %s25
          %p2039 = scmp.lt.s32.totalorder %s2038, 31
          %s2040 = scalar_select %p2039, %s2038, 31
          %s2041 = smul.addr %s2040, 8
          %s2042 = scalar_lea.vmem %s4, %s2041
        $region110: #{tpu_custom_call.1} parent=105 // pred_fallthru
          _
        // Predicated region
        $region111: #{tpu_custom_call.1} parent=105 // pred_check
          %p2043 = pneg %p185
        $region112: #{tpu_custom_call.1} parent=105 // pred_check_branch
          %2045 = sbr.rel (%p2043) target = $region114
        $region113: #{tpu_custom_call.1} parent=105 // pred_region
          %s2046 = smul.u32 16, %s25
          %p2047 = scmp.lt.s32.totalorder %s2046, 31
          %s2048 = scalar_select %p2047, %s2046, 31
          %s2049 = smul.addr %s2048, 8
          %s2050 = scalar_lea.vmem %s5, %s2049
        $region114: #{tpu_custom_call.1} parent=105 // pred_fallthru
          _
        // Predicated region
        $region115: #{tpu_custom_call.1} parent=105 // pred_check
          %p2051 = pneg %p211
        $region116: #{tpu_custom_call.1} parent=105 // pred_check_branch
          %2053 = sbr.rel (%p2051) target = $region118
        $region117: #{tpu_custom_call.1} parent=105 // pred_region
          %s2054 = smul.u32 16, %s25
          %p2055 = scmp.lt.s32.totalorder %s2054, 31
          %s2056 = scalar_select %p2055, %s2054, 31
          %s2057 = smul.addr %s2056, 8
          %s2058 = scalar_lea.vmem %s6, %s2057
        $region118: #{tpu_custom_call.1} parent=105 // pred_fallthru
          _
        // Predicated region
        $region119: #{tpu_custom_call.1} parent=105 // pred_check
          %p2059 = pneg %p237
        $region120: #{tpu_custom_call.1} parent=105 // pred_check_branch
          %2061 = sbr.rel (%p2059) target = $region122
        $region121: #{tpu_custom_call.1} parent=105 // pred_region
          %s2062 = smul.u32 16, %s25
          %p2063 = scmp.lt.s32.totalorder %s2062, 31
          %s2064 = scalar_select %p2063, %s2062, 31
          %s2065 = smul.addr %s2064, 8
          %s2066 = scalar_lea.vmem %s7, %s2065
        $region122: #{tpu_custom_call.1} parent=105 // pred_fallthru
          _
      $region106: #{tpu_custom_call.1} parent=5 // pred_fallthru
        _
    $region6: #{tpu_custom_call.1} parent=1 // loop_footer
      %s18 = sadd.s32 1, %s14
    $region7: #{tpu_custom_call.1} parent=1 // loop_footer_branch
      %13 = sbr.rel target = $region3
    $region8: #{tpu_custom_call.1} parent=1 // loop_exit
      _

</llo_original>
